<compile_context>
chip_gen: v7x
topology: tpu7x:2x2x1
jax: 0.10.0
libtpu: 0.0.40
codegen_flags: <defaults>
</compile_context>

<pallas_src>
import functools

import jax
import jax.numpy as jnp
from jax.experimental import pallas as pl
from jax.experimental.pallas import tpu as pltpu


def _round_up(x, m):
    return ((x + m - 1) // m) * m


def _decoder_kernel(z_ref, w1_ref, b1_ref, w2_ref, b2_ref, w3_ref, b3_ref,
                    out_ref):
    # Fused MLP: matmuls on the MXU (f32 accumulation), elementwise in f32.
    z = z_ref[...]

    h1 = jnp.dot(z, w1_ref[...], preferred_element_type=jnp.float32)
    h1 = jnp.maximum(h1 + b1_ref[...], 0.0)                  # bias + ReLU (f32)

    h2 = jnp.dot(h1.astype(w2_ref.dtype), w2_ref[...],
                 preferred_element_type=jnp.float32)
    h2 = jnp.maximum(h2 + b2_ref[...], 0.0)                  # bias + ReLU (f32)

    h3 = jnp.dot(h2.astype(w3_ref.dtype), w3_ref[...],
                 preferred_element_type=jnp.float32)
    h3 = h3 + b3_ref[...]

    out_ref[...] = jax.nn.sigmoid(h3).astype(out_ref.dtype)  # Sigmoid (f32)


@functools.partial(jax.jit, static_argnames=("block_b", "compute_dtype"))
def decoder_forward(z, w1, b1, w2, b2, w3, b3, *,
                    block_b=512, compute_dtype=jnp.bfloat16):
    """Decoder forward pass as a single Pallas kernel.

    z : (B, latent) float32
    wX: (in, out)   float32,  bX: (1, out) float32
    returns (B, out_size) float32

    For best HBM behavior callers can pass z / weights already in
    `compute_dtype` (bf16); the wrapper casts otherwise.
    """
    B, latent = z.shape
    H1 = w1.shape[1]
    H2 = w2.shape[1]
    OUT = w3.shape[1]

    # --- zero-pad hidden dims to 128 lanes (results unchanged: padded
    #     columns get 0*x + 0 bias -> 0 through ReLU, and the matching padded
    #     weight rows are zero).
    H1p = _round_up(H1, 128)
    H2p = _round_up(H2, 128)
    w1p = jnp.pad(w1, ((0, 0), (0, H1p - H1)))
    b1p = jnp.pad(b1, ((0, 0), (0, H1p - H1)))
    w2p = jnp.pad(w2, ((0, H1p - H1), (0, H2p - H2)))
    b2p = jnp.pad(b2, ((0, 0), (0, H2p - H2)))
    w3p = jnp.pad(w3, ((0, H2p - H2), (0, 0)))

    # --- dtypes: matmul operands in compute_dtype, biases/output in f32.
    zc = z.astype(compute_dtype)
    w1c = w1p.astype(compute_dtype)
    w2c = w2p.astype(compute_dtype)
    w3c = w3p.astype(compute_dtype)
    b1f = b1p.astype(jnp.float32)
    b2f = b2p.astype(jnp.float32)
    b3f = b3.astype(jnp.float32)

    # --- batch tiling (multiple of 8 f32 sublanes; don't exceed the batch).
    block_b_eff = min(_round_up(block_b, 8), _round_up(B, 8))
    grid = (pl.cdiv(B, block_b_eff),)

    in_bytes = jnp.dtype(compute_dtype).itemsize

    # --- VMEM budget: double-buffered z/out tiles + weights/biases +
    #     f32 intermediate slabs, with headroom; capped for v7x's 64 MiB part.
    weight_bytes = (w1c.size + w2c.size + w3c.size) * in_bytes
    bias_bytes = (b1f.size + b2f.size + b3f.size) * 4
    tile_bytes = (
        2 * block_b_eff * latent * in_bytes       # z tile, double-buffered
        + 2 * block_b_eff * OUT * 4               # out tile (f32), double-buffered
        + 2 * (weight_bytes + bias_bytes)         # resident weights/biases
        + block_b_eff * (H1p + H2p + OUT) * 4     # f32 intermediates h1/h2/h3
    )
    vmem_limit = min(int(tile_bytes) * 2 + (8 << 20), 40 << 20)

    # --- advisory cost estimate for XLA's scheduler.
    flops = 2 * B * (latent * H1p + H1p * H2p + H2p * OUT)
    cost = pl.CostEstimate(
        flops=flops,
        transcendentals=B * OUT,  # sigmoid exp
        bytes_accessed=(B * latent * in_bytes + weight_bytes + bias_bytes
                        + B * OUT * 4),
    )

    in_specs = [
        pl.BlockSpec((block_b_eff, latent), lambda i: (i, 0)),  # z tile
        pl.BlockSpec((latent, H1p), lambda i: (0, 0)),          # w1 (resident)
        pl.BlockSpec((1, H1p), lambda i: (0, 0)),               # b1
        pl.BlockSpec((H1p, H2p), lambda i: (0, 0)),             # w2
        pl.BlockSpec((1, H2p), lambda i: (0, 0)),               # b2
        pl.BlockSpec((H2p, OUT), lambda i: (0, 0)),             # w3
        pl.BlockSpec((1, OUT), lambda i: (0, 0)),               # b3
    ]
    out_specs = pl.BlockSpec((block_b_eff, OUT), lambda i: (i, 0))

    return pl.pallas_call(
        _decoder_kernel,
        out_shape=jax.ShapeDtypeStruct((B, OUT), jnp.float32),
        grid_spec=pltpu.PrefetchScalarGridSpec(
            num_scalar_prefetch=0,
            grid=grid,
            in_specs=in_specs,
            out_specs=out_specs,
        ),
        compiler_params=pltpu.CompilerParams(
            dimension_semantics=("parallel",),   # shards batch tiles across v7x's 2 TCs
            vmem_limit_bytes=vmem_limit,
        ),
        cost_estimate=cost,
    )(zc, w1c, b1f, w2c, b2f, w3c, b3f)


def init_decoder_params(key, latent_size, out_size):
    """Deterministic synthetic parameters matching nn.Linear shapes."""
    h1 = out_size // 4
    h2 = out_size // 2
    k = jax.random.split(key, 6)

    def linear(kw, kb, fan_in, fan_out):
        bound = 1.0 / jnp.sqrt(fan_in)
        w = jax.random.uniform(kw, (fan_in, fan_out), jnp.float32, -bound, bound)
        b = jax.random.uniform(kb, (1, fan_out), jnp.float32, -bound, bound)
        return w, b

    w1, b1 = linear(k[0], k[1], latent_size, h1)
    w2, b2 = linear(k[2], k[3], h1, h2)
    w3, b3 = linear(k[4], k[5], h2, out_size)
    return w1, b1, w2, b2, w3, b3


def decoder_reference(z, w1, b1, w2, b2, w3, b3):
    """Pure-f32 reference (exact f32 matmuls)."""
    hp = jax.lax.Precision.HIGHEST
    h = jnp.maximum(jnp.dot(z, w1, precision=hp) + b1, 0.0)
    h = jnp.maximum(jnp.dot(h, w2, precision=hp) + b2, 0.0)
    return jax.nn.sigmoid(jnp.dot(h, w3, precision=hp) + b3)


if __name__ == "__main__":
    key = jax.random.PRNGKey(0)
    latent_size = 32
    out_size = 128            # -> hidden sizes 32 and 64
    batch = 1024              # 2 grid steps at block_b=512 (keeps v7x's 2 TCs busy)

    k_param, k_z = jax.random.split(key)
    params = init_decoder_params(k_param, latent_size, out_size)
    z = jax.random.normal(k_z, (batch, latent_size), jnp.float32)

    # Default (bf16 I/O, f32 accumulation) path.
    out = decoder_forward(z, *params)
    out = jax.block_until_ready(out)
    assert out.shape == (batch, out_size) and out.dtype == jnp.float32

    ref = decoder_reference(z, *params)
    assert jnp.allclose(out, ref, atol=5e-2, rtol=5e-2), "bf16 path mismatch"

    # Full-precision path sanity check.
    out_f32 = decoder_forward(z, *params, compute_dtype=jnp.float32)
    out_f32 = jax.block_until_ready(out_f32)
    assert jnp.allclose(out_f32, ref, atol=1e-2, rtol=1e-2), "f32 path mismatch"

    print("KERNEL_OK")
</pallas_src>

<mosaic_0001>
module attributes {stable_mosaic.version = 11 : i64} {
  func.func @_decoder_kernel(%arg0: i32, %arg1: memref<512x32xbf16, #tpu.memory_space<vmem>>, %arg2: memref<32x128xbf16, #tpu.memory_space<vmem>>, %arg3: memref<1x128xf32, #tpu.memory_space<vmem>>, %arg4: memref<128x128xbf16, #tpu.memory_space<vmem>>, %arg5: memref<1x128xf32, #tpu.memory_space<vmem>>, %arg6: memref<128x128xbf16, #tpu.memory_space<vmem>>, %arg7: memref<1x128xf32, #tpu.memory_space<vmem>>, %arg8: memref<512x128xf32, #tpu.memory_space<vmem>>) attributes {dimension_semantics = [#tpu.dimension_semantics<parallel>], iteration_bounds = array<i64: 2>, scalar_prefetch = 0 : i64, scratch_operands = 0 : i64, tpu.core_type = #tpu.core_type<tc>, window_params = [{transform_indices = @transform_0, window_bounds = array<i64: 512, 32>}, {pipeline_mode = #tpu.pipeline_mode<synchronous>, transform_indices = @transform_1, window_bounds = array<i64: 32, 128>}, {pipeline_mode = #tpu.pipeline_mode<synchronous>, transform_indices = @transform_2, window_bounds = array<i64: 1, 128>}, {pipeline_mode = #tpu.pipeline_mode<synchronous>, transform_indices = @transform_3, window_bounds = array<i64: 128, 128>}, {pipeline_mode = #tpu.pipeline_mode<synchronous>, transform_indices = @transform_4, window_bounds = array<i64: 1, 128>}, {pipeline_mode = #tpu.pipeline_mode<synchronous>, transform_indices = @transform_5, window_bounds = array<i64: 128, 128>}, {pipeline_mode = #tpu.pipeline_mode<synchronous>, transform_indices = @transform_6, window_bounds = array<i64: 1, 128>}, {transform_indices = @transform_7, window_bounds = array<i64: 512, 128>}]} {
    %c0 = arith.constant 0 : index
    %c0_0 = arith.constant 0 : index
    %0 = vector.load %arg1[%c0, %c0_0] : memref<512x32xbf16, #tpu.memory_space<vmem>>, vector<512x32xbf16>
    %c0_1 = arith.constant 0 : index
    %c0_2 = arith.constant 0 : index
    %1 = vector.load %arg2[%c0_1, %c0_2] : memref<32x128xbf16, #tpu.memory_space<vmem>>, vector<32x128xbf16>
    %cst = arith.constant dense<0.000000e+00> : vector<512x128xf32>
    %2 = tpu.matmul %0, %1, %cst {dimension_numbers = #tpu.dot_dimension_numbers<[1], [0], [0], [1], [0, 0, 1, 1], [], []>} : vector<512x32xbf16>, vector<32x128xbf16>, vector<512x128xf32> -> vector<512x128xf32>
    %c0_3 = arith.constant 0 : index
    %c0_4 = arith.constant 0 : index
    %3 = vector.load %arg3[%c0_3, %c0_4] : memref<1x128xf32, #tpu.memory_space<vmem>>, vector<1x128xf32>
    %4 = vector.broadcast %3 : vector<1x128xf32> to vector<512x128xf32>
    %5 = arith.addf %2, %4 : vector<512x128xf32>
    %cst_5 = arith.constant 0.000000e+00 : f32
    %6 = vector.broadcast %cst_5 : f32 to vector<512x128xf32>
    %7 = arith.maximumf %5, %6 : vector<512x128xf32>
    %8 = arith.truncf %7 : vector<512x128xf32> to vector<512x128xbf16>
    %c0_6 = arith.constant 0 : index
    %c0_7 = arith.constant 0 : index
    %9 = vector.load %arg4[%c0_6, %c0_7] : memref<128x128xbf16, #tpu.memory_space<vmem>>, vector<128x128xbf16>
    %cst_8 = arith.constant dense<0.000000e+00> : vector<512x128xf32>
    %10 = tpu.matmul %8, %9, %cst_8 {dimension_numbers = #tpu.dot_dimension_numbers<[1], [0], [0], [1], [0, 0, 1, 1], [], []>} : vector<512x128xbf16>, vector<128x128xbf16>, vector<512x128xf32> -> vector<512x128xf32>
    %c0_9 = arith.constant 0 : index
    %c0_10 = arith.constant 0 : index
    %11 = vector.load %arg5[%c0_9, %c0_10] : memref<1x128xf32, #tpu.memory_space<vmem>>, vector<1x128xf32>
    %12 = vector.broadcast %11 : vector<1x128xf32> to vector<512x128xf32>
    %13 = arith.addf %10, %12 : vector<512x128xf32>
    %cst_11 = arith.constant 0.000000e+00 : f32
    %14 = vector.broadcast %cst_11 : f32 to vector<512x128xf32>
    %15 = arith.maximumf %13, %14 : vector<512x128xf32>
    %16 = arith.truncf %15 : vector<512x128xf32> to vector<512x128xbf16>
    %c0_12 = arith.constant 0 : index
    %c0_13 = arith.constant 0 : index
    %17 = vector.load %arg6[%c0_12, %c0_13] : memref<128x128xbf16, #tpu.memory_space<vmem>>, vector<128x128xbf16>
    %cst_14 = arith.constant dense<0.000000e+00> : vector<512x128xf32>
    %18 = tpu.matmul %16, %17, %cst_14 {dimension_numbers = #tpu.dot_dimension_numbers<[1], [0], [0], [1], [0, 0, 1, 1], [], []>} : vector<512x128xbf16>, vector<128x128xbf16>, vector<512x128xf32> -> vector<512x128xf32>
    %c0_15 = arith.constant 0 : index
    %c0_16 = arith.constant 0 : index
    %19 = vector.load %arg7[%c0_15, %c0_16] : memref<1x128xf32, #tpu.memory_space<vmem>>, vector<1x128xf32>
    %20 = vector.broadcast %19 : vector<1x128xf32> to vector<512x128xf32>
    %21 = arith.addf %18, %20 : vector<512x128xf32>
    %22 = arith.negf %21 : vector<512x128xf32>
    %23 = math.exp %22 : vector<512x128xf32>
    %cst_17 = arith.constant 1.000000e+00 : f32
    %24 = vector.broadcast %cst_17 : f32 to vector<512x128xf32>
    %25 = arith.addf %24, %23 : vector<512x128xf32>
    %26 = arith.divf %24, %25 : vector<512x128xf32>
    %c0_18 = arith.constant 0 : index
    %c0_19 = arith.constant 0 : index
    %27 = vector.load %arg8[%c0_18, %c0_19] : memref<512x128xf32, #tpu.memory_space<vmem>>, vector<512x128xf32>
    tpu.vector_store %arg8[%c0_18, %c0_19], %26 {strides = array<i32>} : memref<512x128xf32, #tpu.memory_space<vmem>>, vector<512x128xf32>,
    return
  }
  func.func @transform_0(%arg0: i32) -> (i32, i32) {
    %c0_i32 = arith.constant 0 : i32
    %c0_i32_0 = arith.constant 0 : i32
    return %arg0, %c0_i32 : i32, i32
  }
  func.func @transform_1(%arg0: i32) -> (i32, i32) {
    %c0_i32 = arith.constant 0 : i32
    %c0_i32_0 = arith.constant 0 : i32
    %c0_i32_1 = arith.constant 0 : i32
    return %c0_i32, %c0_i32_0 : i32, i32
  }
  func.func @transform_2(%arg0: i32) -> (i32, i32) {
    %c0_i32 = arith.constant 0 : i32
    %c0_i32_0 = arith.constant 0 : i32
    %c0_i32_1 = arith.constant 0 : i32
    return %c0_i32, %c0_i32_0 : i32, i32
  }
  func.func @transform_3(%arg0: i32) -> (i32, i32) {
    %c0_i32 = arith.constant 0 : i32
    %c0_i32_0 = arith.constant 0 : i32
    %c0_i32_1 = arith.constant 0 : i32
    return %c0_i32, %c0_i32_0 : i32, i32
  }
  func.func @transform_4(%arg0: i32) -> (i32, i32) {
    %c0_i32 = arith.constant 0 : i32
    %c0_i32_0 = arith.constant 0 : i32
    %c0_i32_1 = arith.constant 0 : i32
    return %c0_i32, %c0_i32_0 : i32, i32
  }
  func.func @transform_5(%arg0: i32) -> (i32, i32) {
    %c0_i32 = arith.constant 0 : i32
    %c0_i32_0 = arith.constant 0 : i32
    %c0_i32_1 = arith.constant 0 : i32
    return %c0_i32, %c0_i32_0 : i32, i32
  }
  func.func @transform_6(%arg0: i32) -> (i32, i32) {
    %c0_i32 = arith.constant 0 : i32
    %c0_i32_0 = arith.constant 0 : i32
    %c0_i32_1 = arith.constant 0 : i32
    return %c0_i32, %c0_i32_0 : i32, i32
  }
  func.func @transform_7(%arg0: i32) -> (i32, i32) {
    %c0_i32 = arith.constant 0 : i32
    %c0_i32_0 = arith.constant 0 : i32
    return %arg0, %c0_i32 : i32, i32
  }
}

</mosaic_0001>

<llo_original>
// kernel: decoder_forward.1
$region0: #{decoder_forward.1}
  #allocation0 [shape = 'u32[]', space=smem, size = 0x4, offset = 0x4, fixed_abs, tag = 'smem constant byte address 0x4 - core index']
  #allocation1 [shape = 'u32[144,128]{1,0:T(1,128)}', space=vmem, size = 0x12000, scoped, tag = 'internal scratch']
  %s0 = inlined_call_operand.vmem [shape: bf16[1024,32], index: 0, kind: input, shape index: {}]
  %s1 = inlined_call_operand.vmem [shape: bf16[32,128], index: 1, kind: input, shape index: {}]
  %s2 = inlined_call_operand.vmem [shape: f32[1,128], index: 2, kind: input, shape index: {}]
  %s3 = inlined_call_operand.vmem [shape: bf16[128,128], index: 3, kind: input, shape index: {}]
  %s4 = inlined_call_operand.vmem [shape: f32[1,128], index: 4, kind: input, shape index: {}]
  %s5 = inlined_call_operand.vmem [shape: bf16[128,128], index: 5, kind: input, shape index: {}]
  %s6 = inlined_call_operand.vmem [shape: f32[1,128], index: 6, kind: input, shape index: {}]
  %s7 = inlined_call_operand.hbm [shape: f32[1024,128], index: 7, kind: output, shape index: {}]
  %s8 = sld [smem:[#allocation0]]
  $region61: #{decoder_forward.1} parent=0
    _
  %s10 = ssub.s32 1, %s8
  %s11 = scalar_select 0, %s10, %s8
  $region1: #{decoder_forward.1} parent=0
    #allocation2 [shape = 'u8[524288]{0}', space=vmem, size = 0x80000, scoped, tag = 'output window, operand 0']
    #allocation3 [shape = 's32[2]{0}', space=sflag, size = 0x8, scoped, tag = 'scoped memory for decoder_forward.1']
    %12 = vsyncpa [#allocation3], 0
    %s13 = scalar_lea.sflag [#allocation3], 1
    %14 = vsyncpa %s13, 0
    loop: start=0, step=1, limit=4
    $region2: #{decoder_forward.1} parent=1 // loop_pre_header
      _
    $region3: #{decoder_forward.1} parent=1 // loop_header
      %s16 = sphi 0, %s20
      %p17 = scmp.ge.s32.totalorder %s16, 4
      %s26 = sphi 0, %s28
      %s29 = sphi 0, %s26
      %s30 = sphi 0, %s29
      %s46 = sphi 0, %s30
      %s50 = sphi 0, %s50
      %s52 = sphi 0, %s50
      %s53 = sphi 0, %s52
      %s67 = sphi 0, %s53
      %s71 = sphi 0, %s71
      %s73 = sphi 0, %s71
      %s74 = sphi 0, %s73
      %s88 = sphi 0, %s74
      %s92 = sphi 0, %s92
      %s94 = sphi 0, %s92
      %s95 = sphi 0, %s94
      %s109 = sphi 0, %s95
      %s113 = sphi 0, %s113
      %s115 = sphi 0, %s113
      %s116 = sphi 0, %s115
      %s130 = sphi 0, %s116
      %s134 = sphi 0, %s134
      %s136 = sphi 0, %s134
      %s137 = sphi 0, %s136
      %s151 = sphi 0, %s137
      %s155 = sphi 0, %s155
      %s157 = sphi 0, %s155
      %s158 = sphi 0, %s157
      %s172 = sphi 0, %s158
      %s178 = sphi 0, %s180
      %s181 = sphi 0, %s178
      %s182 = sphi 0, %s181
      %s198 = sphi 0, %s182
    $region4: #{decoder_forward.1} parent=1 // loop_header_branch
      %19 = sbr.rel (%p17) target = $region8
    $region5: #{decoder_forward.1} parent=1 // loop_body
      %s21 = ssub.s32 %s16, 1
      %s22 = ssub.s32 %s16, 2
      %s23 = sadd.s32 %s16, 1
      %s24 = ssub.s32 %s16, %s23
      %p25 = scmp.eq.s32.totalorder %s24, 0
      %s27 = sadd.s32 %s26, 1
      %s28 = scalar_select %p25, %s26, %s27
      %p31 = pneg %p25
      %p32 = scmp.eq.s32.totalorder %s16, 1
      %p33 = por %p31, %p32
      %p34 = scmp.ne.s32.totalorder %s26, %s29
      %p35 = scmp.eq.s32.totalorder %s16, 0
      %p36 = por %p34, %p35
      %p37 = scmp.ne.s32.totalorder %s26, %s29
      %p38 = scmp.eq.s32.totalorder %s21, 1
      %p39 = por %p37, %p38
      %p40 = scmp.ne.s32.totalorder %s29, %s30
      %p41 = scmp.eq.s32.totalorder %s21, 0
      %p42 = por %p40, %p41
      %p43 = scmp.ne.s32.totalorder %s29, %s30
      %p44 = scmp.eq.s32.totalorder %s22, 1
      %p45 = por %p43, %p44
      %p47 = scmp.ne.s32.totalorder %s30, %s46
      %p48 = scmp.eq.s32.totalorder %s22, 0
      %p49 = por %p47, %p48
      %s51 = sadd.s32 %s50, 1
      %p54 = scmp.eq.s32.totalorder %s16, 1
      %p55 = scmp.ne.s32.totalorder %s50, %s52
      %p56 = scmp.eq.s32.totalorder %s16, 0
      %p57 = por %p55, %p56
      %p58 = scmp.ne.s32.totalorder %s50, %s52
      %p59 = scmp.eq.s32.totalorder %s21, 1
      %p60 = por %p58, %p59
      %p61 = scmp.ne.s32.totalorder %s52, %s53
      %p62 = scmp.eq.s32.totalorder %s21, 0
      %p63 = por %p61, %p62
      %p64 = scmp.ne.s32.totalorder %s52, %s53
      %p65 = scmp.eq.s32.totalorder %s22, 1
      %p66 = por %p64, %p65
      %p68 = scmp.ne.s32.totalorder %s53, %s67
      %p69 = scmp.eq.s32.totalorder %s22, 0
      %p70 = por %p68, %p69
      %s72 = sadd.s32 %s71, 1
      %p75 = scmp.eq.s32.totalorder %s16, 1
      %p76 = scmp.ne.s32.totalorder %s71, %s73
      %p77 = scmp.eq.s32.totalorder %s16, 0
      %p78 = por %p76, %p77
      %p79 = scmp.ne.s32.totalorder %s71, %s73
      %p80 = scmp.eq.s32.totalorder %s21, 1
      %p81 = por %p79, %p80
      %p82 = scmp.ne.s32.totalorder %s73, %s74
      %p83 = scmp.eq.s32.totalorder %s21, 0
      %p84 = por %p82, %p83
      %p85 = scmp.ne.s32.totalorder %s73, %s74
      %p86 = scmp.eq.s32.totalorder %s22, 1
      %p87 = por %p85, %p86
      %p89 = scmp.ne.s32.totalorder %s74, %s88
      %p90 = scmp.eq.s32.totalorder %s22, 0
      %p91 = por %p89, %p90
      %s93 = sadd.s32 %s92, 1
      %p96 = scmp.eq.s32.totalorder %s16, 1
      %p97 = scmp.ne.s32.totalorder %s92, %s94
      %p98 = scmp.eq.s32.totalorder %s16, 0
      %p99 = por %p97, %p98
      %p100 = scmp.ne.s32.totalorder %s92, %s94
      %p101 = scmp.eq.s32.totalorder %s21, 1
      %p102 = por %p100, %p101
      %p103 = scmp.ne.s32.totalorder %s94, %s95
      %p104 = scmp.eq.s32.totalorder %s21, 0
      %p105 = por %p103, %p104
      %p106 = scmp.ne.s32.totalorder %s94, %s95
      %p107 = scmp.eq.s32.totalorder %s22, 1
      %p108 = por %p106, %p107
      %p110 = scmp.ne.s32.totalorder %s95, %s109
      %p111 = scmp.eq.s32.totalorder %s22, 0
      %p112 = por %p110, %p111
      %s114 = sadd.s32 %s113, 1
      %p117 = scmp.eq.s32.totalorder %s16, 1
      %p118 = scmp.ne.s32.totalorder %s113, %s115
      %p119 = scmp.eq.s32.totalorder %s16, 0
      %p120 = por %p118, %p119
      %p121 = scmp.ne.s32.totalorder %s113, %s115
      %p122 = scmp.eq.s32.totalorder %s21, 1
      %p123 = por %p121, %p122
      %p124 = scmp.ne.s32.totalorder %s115, %s116
      %p125 = scmp.eq.s32.totalorder %s21, 0
      %p126 = por %p124, %p125
      %p127 = scmp.ne.s32.totalorder %s115, %s116
      %p128 = scmp.eq.s32.totalorder %s22, 1
      %p129 = por %p127, %p128
      %p131 = scmp.ne.s32.totalorder %s116, %s130
      %p132 = scmp.eq.s32.totalorder %s22, 0
      %p133 = por %p131, %p132
      %s135 = sadd.s32 %s134, 1
      %p138 = scmp.eq.s32.totalorder %s16, 1
      %p139 = scmp.ne.s32.totalorder %s134, %s136
      %p140 = scmp.eq.s32.totalorder %s16, 0
      %p141 = por %p139, %p140
      %p142 = scmp.ne.s32.totalorder %s134, %s136
      %p143 = scmp.eq.s32.totalorder %s21, 1
      %p144 = por %p142, %p143
      %p145 = scmp.ne.s32.totalorder %s136, %s137
      %p146 = scmp.eq.s32.totalorder %s21, 0
      %p147 = por %p145, %p146
      %p148 = scmp.ne.s32.totalorder %s136, %s137
      %p149 = scmp.eq.s32.totalorder %s22, 1
      %p150 = por %p148, %p149
      %p152 = scmp.ne.s32.totalorder %s137, %s151
      %p153 = scmp.eq.s32.totalorder %s22, 0
      %p154 = por %p152, %p153
      %s156 = sadd.s32 %s155, 1
      %p159 = scmp.eq.s32.totalorder %s16, 1
      %p160 = scmp.ne.s32.totalorder %s155, %s157
      %p161 = scmp.eq.s32.totalorder %s16, 0
      %p162 = por %p160, %p161
      %p163 = scmp.ne.s32.totalorder %s155, %s157
      %p164 = scmp.eq.s32.totalorder %s21, 1
      %p165 = por %p163, %p164
      %p166 = scmp.ne.s32.totalorder %s157, %s158
      %p167 = scmp.eq.s32.totalorder %s21, 0
      %p168 = por %p166, %p167
      %p169 = scmp.ne.s32.totalorder %s157, %s158
      %p170 = scmp.eq.s32.totalorder %s22, 1
      %p171 = por %p169, %p170
      %p173 = scmp.ne.s32.totalorder %s158, %s172
      %p174 = scmp.eq.s32.totalorder %s22, 0
      %p175 = por %p173, %p174
      %s176 = ssub.s32 %s16, %s23
      %p177 = scmp.eq.s32.totalorder %s176, 0
      %s179 = sadd.s32 %s178, 1
      %s180 = scalar_select %p177, %s178, %s179
      %p183 = pneg %p177
      %p184 = scmp.eq.s32.totalorder %s16, 1
      %p185 = por %p183, %p184
      %p186 = scmp.ne.s32.totalorder %s178, %s181
      %p187 = scmp.eq.s32.totalorder %s16, 0
      %p188 = por %p186, %p187
      %p189 = scmp.ne.s32.totalorder %s178, %s181
      %p190 = scmp.eq.s32.totalorder %s21, 1
      %p191 = por %p189, %p190
      %p192 = scmp.ne.s32.totalorder %s181, %s182
      %p193 = scmp.eq.s32.totalorder %s21, 0
      %p194 = por %p192, %p193
      %p195 = scmp.ne.s32.totalorder %s181, %s182
      %p196 = scmp.eq.s32.totalorder %s22, 1
      %p197 = por %p195, %p196
      %p199 = scmp.ne.s32.totalorder %s182, %s198
      %p200 = scmp.eq.s32.totalorder %s22, 0
      %p201 = por %p199, %p200
      %p202 = scmp.le.s32.totalorder 1, %s16
      %p203 = scmp.lt.s32.totalorder %s16, 3
      %p204 = pnand %p202, %p203
      %p205 = pneg %p204
      // Predicated region
      $region9: #{decoder_forward.1} parent=5 // pred_check
        _
      $region10: #{decoder_forward.1} parent=5 // pred_check_branch
        %207 = sbr.rel (%p204) target = $region12
      $region11: #{decoder_forward.1} parent=5 // pred_region
        %s208 = ssub.s32 %s16, 1
        // Predicated region
        $region13: #{decoder_forward.1} parent=11 // pred_check
          %p209 = pneg %p63
        $region14: #{decoder_forward.1} parent=11 // pred_check_branch
          %211 = sbr.rel (%p209) target = $region16
        $region15: #{decoder_forward.1} parent=11 // pred_region
          _
        $region16: #{decoder_forward.1} parent=11 // pred_fallthru
          _
        // Predicated region
        $region17: #{decoder_forward.1} parent=11 // pred_check
          %p212 = pneg %p84
        $region18: #{decoder_forward.1} parent=11 // pred_check_branch
          %214 = sbr.rel (%p212) target = $region20
        $region19: #{decoder_forward.1} parent=11 // pred_region
          _
        $region20: #{decoder_forward.1} parent=11 // pred_fallthru
          _
        // Predicated region
        $region21: #{decoder_forward.1} parent=11 // pred_check
          %p215 = pneg %p105
        $region22: #{decoder_forward.1} parent=11 // pred_check_branch
          %217 = sbr.rel (%p215) target = $region24
        $region23: #{decoder_forward.1} parent=11 // pred_region
          _
        $region24: #{decoder_forward.1} parent=11 // pred_fallthru
          _
        // Predicated region
        $region25: #{decoder_forward.1} parent=11 // pred_check
          %p218 = pneg %p126
        $region26: #{decoder_forward.1} parent=11 // pred_check_branch
          %220 = sbr.rel (%p218) target = $region28
        $region27: #{decoder_forward.1} parent=11 // pred_region
          _
        $region28: #{decoder_forward.1} parent=11 // pred_fallthru
          _
        // Predicated region
        $region29: #{decoder_forward.1} parent=11 // pred_check
          %p221 = pneg %p147
        $region30: #{decoder_forward.1} parent=11 // pred_check_branch
          %223 = sbr.rel (%p221) target = $region32
        $region31: #{decoder_forward.1} parent=11 // pred_region
          _
        $region32: #{decoder_forward.1} parent=11 // pred_fallthru
          _
        // Predicated region
        $region33: #{decoder_forward.1} parent=11 // pred_check
          %p224 = pneg %p168
        $region34: #{decoder_forward.1} parent=11 // pred_check_branch
          %226 = sbr.rel (%p224) target = $region36
        $region35: #{decoder_forward.1} parent=11 // pred_region
          _
        $region36: #{decoder_forward.1} parent=11 // pred_fallthru
          _
      $region12: #{decoder_forward.1} parent=5 // pred_fallthru
        _
      %p227 = scmp.lt.s32.totalorder %s16, 2
      // Predicated region
      $region37: #{decoder_forward.1} parent=5 // pred_check
        %p228 = pneg %p227
      $region38: #{decoder_forward.1} parent=5 // pred_check_branch
        %230 = sbr.rel (%p228) target = $region40
      $region39: #{decoder_forward.1} parent=5 // pred_region
        // Predicated region
        $region41: #{decoder_forward.1} parent=39 // pred_check
          %p231 = pneg %p36
        $region42: #{decoder_forward.1} parent=39 // pred_check_branch
          %233 = sbr.rel (%p231) target = $region44
        $region43: #{decoder_forward.1} parent=39 // pred_region
          %s234 = smul.u32 64, %s16
          %p235 = scmp.lt.s32.totalorder %s234, 127
          %s236 = scalar_select %p235, %s234, 127
          %s237 = smul.addr %s236, 4
          %s238 = scalar_lea.vmem %s0, %s237
          %s239 = smul.u32 64, %s16
        $region44: #{decoder_forward.1} parent=39 // pred_fallthru
          _
      $region40: #{decoder_forward.1} parent=5 // pred_fallthru
        _
      %p240 = scmp.le.s32.totalorder 1, %s16
      %p241 = scmp.lt.s32.totalorder %s16, 3
      %p242 = pnand %p240, %p241
      %p243 = pneg %p242
      // Predicated region
      $region45: #{decoder_forward.1} parent=5 // pred_check
        _
      $region46: #{decoder_forward.1} parent=5 // pred_check_branch
        %245 = sbr.rel (%p242) target = $region48
      $region47: #{decoder_forward.1} parent=5 // pred_region
        %s246 = ssub.s32 %s16, 1
        %s247 = smul.u32 64, %s21
        %p248 = scmp.lt.s32.totalorder %s247, 127
        %s249 = scalar_select %p248, %s247, 127
        %s250 = smul.addr %s249, 4
        %s251 = scalar_lea.vmem %s0, %s250
        %p252 = pneg %p42
        %p253 = pneg %p39
        %p254 = pneg %p63
        %p255 = pneg %p60
        %p256 = pneg %p84
        %p257 = pneg %p81
        %p258 = pneg %p105
        %p259 = pneg %p102
        %p260 = pneg %p126
        %p261 = pneg %p123
        %p262 = pneg %p147
        %p263 = pneg %p144
        %p264 = pneg %p168
        %p265 = pneg %p165
        %p266 = pneg %p194
        %p267 = pneg %p191
        %s268 = sand.u32 %s181, 1
        %s269 = scalar_lea.sflag [#allocation3], %s268
        %s270 = sand.u32 %s181, 1
        %s271 = smul.addr %s270, 512
        %s272 = scalar_lea.vmem [#allocation2], %s271
        %s273 = smul.u32 64, %s21
        %p274 = scmp.lt.s32.totalorder %s273, 127
        %s275 = scalar_select %p274, %s273, 127
        %s276 = smul.addr %s275, 4
        %s277 = scalar_lea.vmem %s0, %s276
        %s278 = smul.u32 64, %s21
        %s279 = smul.u32 64, %s21
        %v281 = vld [vmem:[%s277] sm:$0xf]
        %v282 = vld [vmem:[%s277 + $0x4] sm:$0xf]
        %v283 = vld [vmem:[%s277 + $0x8] sm:$0xf]
        %v284 = vld [vmem:[%s277 + $0xc] sm:$0xf]
        %v285 = vld [vmem:[%s277 + $0x10] sm:$0xf]
        %v286 = vld [vmem:[%s277 + $0x14] sm:$0xf]
        %v287 = vld [vmem:[%s277 + $0x18] sm:$0xf]
        %v288 = vld [vmem:[%s277 + $0x1c] sm:$0xf]
        %v289 = vld [vmem:[%s277 + $0x20] sm:$0xf]
        %v290 = vld [vmem:[%s277 + $0x24] sm:$0xf]
        %v291 = vld [vmem:[%s277 + $0x28] sm:$0xf]
        %v292 = vld [vmem:[%s277 + $0x2c] sm:$0xf]
        %v293 = vld [vmem:[%s277 + $0x30] sm:$0xf]
        %v294 = vld [vmem:[%s277 + $0x34] sm:$0xf]
        %v295 = vld [vmem:[%s277 + $0x38] sm:$0xf]
        %v296 = vld [vmem:[%s277 + $0x3c] sm:$0xf]
        %v297 = vld [vmem:[%s277 + $0x40] sm:$0xf]
        %v298 = vld [vmem:[%s277 + $0x44] sm:$0xf]
        %v299 = vld [vmem:[%s277 + $0x48] sm:$0xf]
        %v300 = vld [vmem:[%s277 + $0x4c] sm:$0xf]
        %v301 = vld [vmem:[%s277 + $0x50] sm:$0xf]
        %v302 = vld [vmem:[%s277 + $0x54] sm:$0xf]
        %v303 = vld [vmem:[%s277 + $0x58] sm:$0xf]
        %v304 = vld [vmem:[%s277 + $0x5c] sm:$0xf]
        %v305 = vld [vmem:[%s277 + $0x60] sm:$0xf]
        %v306 = vld [vmem:[%s277 + $0x64] sm:$0xf]
        %v307 = vld [vmem:[%s277 + $0x68] sm:$0xf]
        %v308 = vld [vmem:[%s277 + $0x6c] sm:$0xf]
        %v309 = vld [vmem:[%s277 + $0x70] sm:$0xf]
        %v310 = vld [vmem:[%s277 + $0x74] sm:$0xf]
        %v311 = vld [vmem:[%s277 + $0x78] sm:$0xf]
        %v312 = vld [vmem:[%s277 + $0x7c] sm:$0xf]
        %v313 = vld [vmem:[%s277 + $0x80] sm:$0xf]
        %v314 = vld [vmem:[%s277 + $0x84] sm:$0xf]
        %v315 = vld [vmem:[%s277 + $0x88] sm:$0xf]
        %v316 = vld [vmem:[%s277 + $0x8c] sm:$0xf]
        %v317 = vld [vmem:[%s277 + $0x90] sm:$0xf]
        %v318 = vld [vmem:[%s277 + $0x94] sm:$0xf]
        %v319 = vld [vmem:[%s277 + $0x98] sm:$0xf]
        %v320 = vld [vmem:[%s277 + $0x9c] sm:$0xf]
        %v321 = vld [vmem:[%s277 + $0xa0] sm:$0xf]
        %v322 = vld [vmem:[%s277 + $0xa4] sm:$0xf]
        %v323 = vld [vmem:[%s277 + $0xa8] sm:$0xf]
        %v324 = vld [vmem:[%s277 + $0xac] sm:$0xf]
        %v325 = vld [vmem:[%s277 + $0xb0] sm:$0xf]
        %v326 = vld [vmem:[%s277 + $0xb4] sm:$0xf]
        %v327 = vld [vmem:[%s277 + $0xb8] sm:$0xf]
        %v328 = vld [vmem:[%s277 + $0xbc] sm:$0xf]
        %v329 = vld [vmem:[%s277 + $0xc0] sm:$0xf]
        %v330 = vld [vmem:[%s277 + $0xc4] sm:$0xf]
        %v331 = vld [vmem:[%s277 + $0xc8] sm:$0xf]
        %v332 = vld [vmem:[%s277 + $0xcc] sm:$0xf]
        %v333 = vld [vmem:[%s277 + $0xd0] sm:$0xf]
        %v334 = vld [vmem:[%s277 + $0xd4] sm:$0xf]
        %v335 = vld [vmem:[%s277 + $0xd8] sm:$0xf]
        %v336 = vld [vmem:[%s277 + $0xdc] sm:$0xf]
        %v337 = vld [vmem:[%s277 + $0xe0] sm:$0xf]
        %v338 = vld [vmem:[%s277 + $0xe4] sm:$0xf]
        %v339 = vld [vmem:[%s277 + $0xe8] sm:$0xf]
        %v340 = vld [vmem:[%s277 + $0xec] sm:$0xf]
        %v341 = vld [vmem:[%s277 + $0xf0] sm:$0xf]
        %v342 = vld [vmem:[%s277 + $0xf4] sm:$0xf]
        %v343 = vld [vmem:[%s277 + $0xf8] sm:$0xf]
        %v344 = vld [vmem:[%s277 + $0xfc] sm:$0xf]
        %v345 = vld [vmem:[%s1] sm:$0xf]
        %v346 = vld [vmem:[%s1 + $0x4] sm:$0xf]
        %v347 = vld [vmem:[%s1 + $0x8] sm:$0xf]
        %v348 = vld [vmem:[%s1 + $0xc] sm:$0xf]
        %v349 = vld [vmem:[%s2] sm:$0x1]
        %v351 = vlaneseq
        %v352 = vshrl.u32 %v351, 7
        %v353 = vsub.s32 0, %v352
        %v354 = vrot.slane %v349, %v353
        %v420 = vunpack.c.l.b16 %v281
        %v421 = vunpack.c.l.b16 %v282
        %v422 = vunpack.c.l.b16 %v283
        %v423 = vunpack.c.l.b16 %v284
        %v424 = vunpack.c.l.b16 %v285
        %v425 = vunpack.c.l.b16 %v286
        %v426 = vunpack.c.l.b16 %v287
        %v427 = vunpack.c.l.b16 %v288
        %v428 = vunpack.c.l.b16 %v289
        %v429 = vunpack.c.l.b16 %v290
        %v430 = vunpack.c.l.b16 %v291
        %v431 = vunpack.c.l.b16 %v292
        %v432 = vunpack.c.l.b16 %v293
        %v433 = vunpack.c.l.b16 %v294
        %v434 = vunpack.c.l.b16 %v295
        %v435 = vunpack.c.l.b16 %v296
        %v436 = vunpack.c.l.b16 %v297
        %v437 = vunpack.c.l.b16 %v298
        %v438 = vunpack.c.l.b16 %v299
        %v439 = vunpack.c.l.b16 %v300
        %v440 = vunpack.c.l.b16 %v301
        %v441 = vunpack.c.l.b16 %v302
        %v442 = vunpack.c.l.b16 %v303
        %v443 = vunpack.c.l.b16 %v304
        %v444 = vunpack.c.l.b16 %v305
        %v445 = vunpack.c.l.b16 %v306
        %v446 = vunpack.c.l.b16 %v307
        %v447 = vunpack.c.l.b16 %v308
        %v448 = vunpack.c.l.b16 %v309
        %v449 = vunpack.c.l.b16 %v310
        %v450 = vunpack.c.l.b16 %v311
        %v451 = vunpack.c.l.b16 %v312
        %v452 = vunpack.c.l.b16 %v313
        %v453 = vunpack.c.l.b16 %v314
        %v454 = vunpack.c.l.b16 %v315
        %v455 = vunpack.c.l.b16 %v316
        %v456 = vunpack.c.l.b16 %v317
        %v457 = vunpack.c.l.b16 %v318
        %v458 = vunpack.c.l.b16 %v319
        %v459 = vunpack.c.l.b16 %v320
        %v460 = vunpack.c.l.b16 %v321
        %v461 = vunpack.c.l.b16 %v322
        %v462 = vunpack.c.l.b16 %v323
        %v463 = vunpack.c.l.b16 %v324
        %v464 = vunpack.c.l.b16 %v325
        %v465 = vunpack.c.l.b16 %v326
        %v466 = vunpack.c.l.b16 %v327
        %v467 = vunpack.c.l.b16 %v328
        %v468 = vunpack.c.l.b16 %v329
        %v469 = vunpack.c.l.b16 %v330
        %v470 = vunpack.c.l.b16 %v331
        %v471 = vunpack.c.l.b16 %v332
        %v472 = vunpack.c.l.b16 %v333
        %v473 = vunpack.c.l.b16 %v334
        %v474 = vunpack.c.l.b16 %v335
        %v475 = vunpack.c.l.b16 %v336
        %v476 = vunpack.c.l.b16 %v337
        %v477 = vunpack.c.l.b16 %v338
        %v478 = vunpack.c.l.b16 %v339
        %v479 = vunpack.c.l.b16 %v340
        %v480 = vunpack.c.l.b16 %v341
        %v481 = vunpack.c.l.b16 %v342
        %v482 = vunpack.c.l.b16 %v343
        %v483 = vunpack.c.l.b16 %v344
        %v484 = vpack.c.b16 %v421, %v420
        %v485 = vpack.c.b16 %v423, %v422
        %v486 = vpack.c.b16 %v425, %v424
        %v487 = vpack.c.b16 %v427, %v426
        %v488 = vpack.c.b16 %v429, %v428
        %v489 = vpack.c.b16 %v431, %v430
        %v490 = vpack.c.b16 %v433, %v432
        %v491 = vpack.c.b16 %v435, %v434
        %v492 = vpack.c.b16 %v437, %v436
        %v493 = vpack.c.b16 %v439, %v438
        %v494 = vpack.c.b16 %v441, %v440
        %v495 = vpack.c.b16 %v443, %v442
        %v496 = vpack.c.b16 %v445, %v444
        %v497 = vpack.c.b16 %v447, %v446
        %v498 = vpack.c.b16 %v449, %v448
        %v499 = vpack.c.b16 %v451, %v450
        %v500 = vpack.c.b16 %v453, %v452
        %v501 = vpack.c.b16 %v455, %v454
        %v502 = vpack.c.b16 %v457, %v456
        %v503 = vpack.c.b16 %v459, %v458
        %v504 = vpack.c.b16 %v461, %v460
        %v505 = vpack.c.b16 %v463, %v462
        %v506 = vpack.c.b16 %v465, %v464
        %v507 = vpack.c.b16 %v467, %v466
        %v508 = vpack.c.b16 %v469, %v468
        %v509 = vpack.c.b16 %v471, %v470
        %v510 = vpack.c.b16 %v473, %v472
        %v511 = vpack.c.b16 %v475, %v474
        %v512 = vpack.c.b16 %v477, %v476
        %v513 = vpack.c.b16 %v479, %v478
        %v514 = vpack.c.b16 %v481, %v480
        %v515 = vpack.c.b16 %v483, %v482
        %v520 = vunpack.c.l.b16 %v345
        %v521 = vunpack.c.l.b16 %v346
        %v522 = vunpack.c.l.b16 %v347
        %v523 = vunpack.c.l.b16 %v348
        %v524 = vpack.c.b16 %v521, %v520
        %v525 = vpack.c.b16 %v523, %v522
        %vm528 = vcmask 261120
        %v530 = vsel %vm528, %v484, 0
        %v533 = vsel %vm528, %v485, 0
        %v536 = vsel %vm528, %v486, 0
        %v539 = vsel %vm528, %v487, 0
        %v542 = vsel %vm528, %v488, 0
        %v545 = vsel %vm528, %v489, 0
        %v548 = vsel %vm528, %v490, 0
        %v551 = vsel %vm528, %v491, 0
        %v554 = vsel %vm528, %v492, 0
        %v557 = vsel %vm528, %v493, 0
        %v560 = vsel %vm528, %v494, 0
        %v563 = vsel %vm528, %v495, 0
        %v566 = vsel %vm528, %v496, 0
        %v569 = vsel %vm528, %v497, 0
        %v572 = vsel %vm528, %v498, 0
        %v575 = vsel %vm528, %v499, 0
        %v578 = vsel %vm528, %v500, 0
        %v581 = vsel %vm528, %v501, 0
        %v584 = vsel %vm528, %v502, 0
        %v587 = vsel %vm528, %v503, 0
        %v590 = vsel %vm528, %v504, 0
        %v593 = vsel %vm528, %v505, 0
        %v596 = vsel %vm528, %v506, 0
        %v599 = vsel %vm528, %v507, 0
        %v602 = vsel %vm528, %v508, 0
        %v605 = vsel %vm528, %v509, 0
        %v608 = vsel %vm528, %v510, 0
        %v611 = vsel %vm528, %v511, 0
        %v614 = vsel %vm528, %v512, 0
        %v617 = vsel %vm528, %v513, 0
        %v620 = vsel %vm528, %v514, 0
        %v623 = vsel %vm528, %v515, 0
        %625 = vmatprep.subr.bf16.mxu0 0
        %626 = vmatpush1.bf16.msra.mxu0 %v524
        %627 = vmatprep.subr.bf16.mxu0 0
        %628 = vmatpush1.bf16.msra.mxu0 %v525
        %629 = vmatprep.subr.bf16.mxu0 0
        %630 = vmatpush1.bf16.msra.mxu0 0
        %631 = vmatprep.subr.bf16.mxu0 0
        %632 = vmatpush1.bf16.msra.mxu0 0
        %633 = vmatprep.subr.bf16.mxu0 0
        %634 = vmatpush1.bf16.msra.mxu0 0
        %635 = vmatprep.subr.bf16.mxu0 0
        %636 = vmatpush1.bf16.msra.mxu0 0
        %637 = vmatprep.subr.bf16.mxu0 0
        %638 = vmatpush1.bf16.msra.mxu0 0
        %639 = vmatprep.subr.bf16.mxu0 0
        %640 = vmatpush1.bf16.msra.mxu0 0
        %641 = vmatprep.subr.bf16.mxu0 0
        %642 = vmatpush1.bf16.msra.mxu0 0
        %643 = vmatprep.subr.bf16.mxu0 0
        %644 = vmatpush1.bf16.msra.mxu0 0
        %645 = vmatprep.subr.bf16.mxu0 0
        %646 = vmatpush1.bf16.msra.mxu0 0
        %647 = vmatprep.subr.bf16.mxu0 0
        %648 = vmatpush1.bf16.msra.mxu0 0
        %649 = vmatprep.subr.bf16.mxu0 0
        %650 = vmatpush1.bf16.msra.mxu0 0
        %651 = vmatprep.subr.bf16.mxu0 0
        %652 = vmatpush1.bf16.msra.mxu0 0
        %653 = vmatprep.subr.bf16.mxu0 0
        %654 = vmatpush1.bf16.msra.mxu0 0
        %655 = vmatprep.subr.bf16.mxu0 0
        %656 = vmatpush1.bf16.msra.mxu0 0
        %657 = vmatprep.mubr.bf16.mxu0 0
        %658 = vmatmul.mubr.bf16.gmra.mrb[0].mxu0 %v530
        %v659 = vpop.f32.mrb[0].mxu0
        %v660 = vadd.f32 %v354, %v659
        %v661 = vpop.f32.mrb[0].mxu0
        %v662 = vpop.f32.mrb[0].mxu0
        %v663 = vadd.f32 %v354, %v662
        %v664 = vpop.f32.mrb[0].mxu0
        %665 = vmatprep.mubr.bf16.mxu0 0
        %666 = vmatmul.mubr.bf16.gmra.mrb[0].mxu0 %v533
        %v667 = vpop.f32.mrb[0].mxu0
        %v668 = vadd.f32 %v354, %v667
        %v669 = vpop.f32.mrb[0].mxu0
        %v670 = vpop.f32.mrb[0].mxu0
        %v671 = vadd.f32 %v354, %v670
        %v672 = vpop.f32.mrb[0].mxu0
        %673 = vmatprep.mubr.bf16.mxu0 0
        %674 = vmatmul.mubr.bf16.gmra.mrb[0].mxu0 %v536
        %v675 = vpop.f32.mrb[0].mxu0
        %v676 = vadd.f32 %v354, %v675
        %v677 = vpop.f32.mrb[0].mxu0
        %v678 = vpop.f32.mrb[0].mxu0
        %v679 = vadd.f32 %v354, %v678
        %v680 = vpop.f32.mrb[0].mxu0
        %681 = vmatprep.mubr.bf16.mxu0 0
        %682 = vmatmul.mubr.bf16.gmra.mrb[0].mxu0 %v539
        %v683 = vpop.f32.mrb[0].mxu0
        %v684 = vadd.f32 %v354, %v683
        %v685 = vpop.f32.mrb[0].mxu0
        %v686 = vpop.f32.mrb[0].mxu0
        %v687 = vadd.f32 %v354, %v686
        %v688 = vpop.f32.mrb[0].mxu0
        %689 = vmatprep.mubr.bf16.mxu0 0
        %690 = vmatmul.mubr.bf16.gmra.mrb[0].mxu0 %v542
        %v691 = vpop.f32.mrb[0].mxu0
        %v692 = vadd.f32 %v354, %v691
        %v693 = vpop.f32.mrb[0].mxu0
        %v694 = vpop.f32.mrb[0].mxu0
        %v695 = vadd.f32 %v354, %v694
        %v696 = vpop.f32.mrb[0].mxu0
        %697 = vmatprep.mubr.bf16.mxu0 0
        %698 = vmatmul.mubr.bf16.gmra.mrb[0].mxu0 %v545
        %v699 = vpop.f32.mrb[0].mxu0
        %v700 = vadd.f32 %v354, %v699
        %v701 = vpop.f32.mrb[0].mxu0
        %v702 = vpop.f32.mrb[0].mxu0
        %v703 = vadd.f32 %v354, %v702
        %v704 = vpop.f32.mrb[0].mxu0
        %705 = vmatprep.mubr.bf16.mxu0 0
        %706 = vmatmul.mubr.bf16.gmra.mrb[0].mxu0 %v548
        %v707 = vpop.f32.mrb[0].mxu0
        %v708 = vadd.f32 %v354, %v707
        %v709 = vpop.f32.mrb[0].mxu0
        %v710 = vpop.f32.mrb[0].mxu0
        %v711 = vadd.f32 %v354, %v710
        %v712 = vpop.f32.mrb[0].mxu0
        %713 = vmatprep.mubr.bf16.mxu0 0
        %714 = vmatmul.mubr.bf16.gmra.mrb[0].mxu0 %v551
        %v715 = vpop.f32.mrb[0].mxu0
        %v716 = vadd.f32 %v354, %v715
        %v717 = vpop.f32.mrb[0].mxu0
        %v718 = vpop.f32.mrb[0].mxu0
        %v719 = vadd.f32 %v354, %v718
        %v720 = vpop.f32.mrb[0].mxu0
        %721 = vmatprep.mubr.bf16.mxu0 0
        %722 = vmatmul.mubr.bf16.gmra.mrb[0].mxu0 %v554
        %v723 = vpop.f32.mrb[0].mxu0
        %v724 = vadd.f32 %v354, %v723
        %v725 = vpop.f32.mrb[0].mxu0
        %v726 = vpop.f32.mrb[0].mxu0
        %v727 = vadd.f32 %v354, %v726
        %v728 = vpop.f32.mrb[0].mxu0
        %729 = vmatprep.mubr.bf16.mxu0 0
        %730 = vmatmul.mubr.bf16.gmra.mrb[0].mxu0 %v557
        %v731 = vpop.f32.mrb[0].mxu0
        %v732 = vadd.f32 %v354, %v731
        %v733 = vpop.f32.mrb[0].mxu0
        %v734 = vpop.f32.mrb[0].mxu0
        %v735 = vadd.f32 %v354, %v734
        %v736 = vpop.f32.mrb[0].mxu0
        %737 = vmatprep.mubr.bf16.mxu0 0
        %738 = vmatmul.mubr.bf16.gmra.mrb[0].mxu0 %v560
        %v739 = vpop.f32.mrb[0].mxu0
        %v740 = vadd.f32 %v354, %v739
        %v741 = vpop.f32.mrb[0].mxu0
        %v742 = vpop.f32.mrb[0].mxu0
        %v743 = vadd.f32 %v354, %v742
        %v744 = vpop.f32.mrb[0].mxu0
        %745 = vmatprep.mubr.bf16.mxu0 0
        %746 = vmatmul.mubr.bf16.gmra.mrb[0].mxu0 %v563
        %v747 = vpop.f32.mrb[0].mxu0
        %v748 = vadd.f32 %v354, %v747
        %v749 = vpop.f32.mrb[0].mxu0
        %v750 = vpop.f32.mrb[0].mxu0
        %v751 = vadd.f32 %v354, %v750
        %v752 = vpop.f32.mrb[0].mxu0
        %753 = vmatprep.mubr.bf16.mxu0 0
        %754 = vmatmul.mubr.bf16.gmra.mrb[0].mxu0 %v566
        %v755 = vpop.f32.mrb[0].mxu0
        %v756 = vadd.f32 %v354, %v755
        %v757 = vpop.f32.mrb[0].mxu0
        %v758 = vpop.f32.mrb[0].mxu0
        %v759 = vadd.f32 %v354, %v758
        %v760 = vpop.f32.mrb[0].mxu0
        %761 = vmatprep.mubr.bf16.mxu0 0
        %762 = vmatmul.mubr.bf16.gmra.mrb[0].mxu0 %v569
        %v763 = vpop.f32.mrb[0].mxu0
        %v764 = vadd.f32 %v354, %v763
        %v765 = vpop.f32.mrb[0].mxu0
        %v766 = vpop.f32.mrb[0].mxu0
        %v767 = vadd.f32 %v354, %v766
        %v768 = vpop.f32.mrb[0].mxu0
        %769 = vmatprep.mubr.bf16.mxu0 0
        %770 = vmatmul.mubr.bf16.gmra.mrb[0].mxu0 %v572
        %v771 = vpop.f32.mrb[0].mxu0
        %v772 = vadd.f32 %v354, %v771
        %v773 = vpop.f32.mrb[0].mxu0
        %v774 = vpop.f32.mrb[0].mxu0
        %v775 = vadd.f32 %v354, %v774
        %v776 = vpop.f32.mrb[0].mxu0
        %777 = vmatprep.mubr.bf16.mxu0 0
        %778 = vmatmul.mubr.bf16.gmra.mrb[0].mxu0 %v575
        %v779 = vpop.f32.mrb[0].mxu0
        %v780 = vadd.f32 %v354, %v779
        %v781 = vpop.f32.mrb[0].mxu0
        %v782 = vpop.f32.mrb[0].mxu0
        %v783 = vadd.f32 %v354, %v782
        %v784 = vpop.f32.mrb[0].mxu0
        %785 = vmatprep.mubr.bf16.mxu0 0
        %786 = vmatmul.mubr.bf16.gmra.mrb[0].mxu0 %v578
        %v787 = vpop.f32.mrb[0].mxu0
        %v788 = vadd.f32 %v354, %v787
        %v789 = vpop.f32.mrb[0].mxu0
        %v790 = vpop.f32.mrb[0].mxu0
        %v791 = vadd.f32 %v354, %v790
        %v792 = vpop.f32.mrb[0].mxu0
        %793 = vmatprep.mubr.bf16.mxu0 0
        %794 = vmatmul.mubr.bf16.gmra.mrb[0].mxu0 %v581
        %v795 = vpop.f32.mrb[0].mxu0
        %v796 = vadd.f32 %v354, %v795
        %v797 = vpop.f32.mrb[0].mxu0
        %v798 = vpop.f32.mrb[0].mxu0
        %v799 = vadd.f32 %v354, %v798
        %v800 = vpop.f32.mrb[0].mxu0
        %801 = vmatprep.mubr.bf16.mxu0 0
        %802 = vmatmul.mubr.bf16.gmra.mrb[0].mxu0 %v584
        %v803 = vpop.f32.mrb[0].mxu0
        %v804 = vadd.f32 %v354, %v803
        %v805 = vpop.f32.mrb[0].mxu0
        %v806 = vpop.f32.mrb[0].mxu0
        %v807 = vadd.f32 %v354, %v806
        %v808 = vpop.f32.mrb[0].mxu0
        %809 = vmatprep.mubr.bf16.mxu0 0
        %810 = vmatmul.mubr.bf16.gmra.mrb[0].mxu0 %v587
        %v811 = vpop.f32.mrb[0].mxu0
        %v812 = vadd.f32 %v354, %v811
        %v813 = vpop.f32.mrb[0].mxu0
        %v814 = vpop.f32.mrb[0].mxu0
        %v815 = vadd.f32 %v354, %v814
        %v816 = vpop.f32.mrb[0].mxu0
        %817 = vmatprep.mubr.bf16.mxu0 0
        %818 = vmatmul.mubr.bf16.gmra.mrb[0].mxu0 %v590
        %v819 = vpop.f32.mrb[0].mxu0
        %v820 = vadd.f32 %v354, %v819
        %v821 = vpop.f32.mrb[0].mxu0
        %v822 = vpop.f32.mrb[0].mxu0
        %v823 = vadd.f32 %v354, %v822
        %v824 = vpop.f32.mrb[0].mxu0
        %825 = vmatprep.mubr.bf16.mxu0 0
        %826 = vmatmul.mubr.bf16.gmra.mrb[0].mxu0 %v593
        %v827 = vpop.f32.mrb[0].mxu0
        %v828 = vadd.f32 %v354, %v827
        %v829 = vpop.f32.mrb[0].mxu0
        %v830 = vpop.f32.mrb[0].mxu0
        %v831 = vadd.f32 %v354, %v830
        %v832 = vpop.f32.mrb[0].mxu0
        %833 = vmatprep.mubr.bf16.mxu0 0
        %834 = vmatmul.mubr.bf16.gmra.mrb[0].mxu0 %v596
        %v835 = vpop.f32.mrb[0].mxu0
        %v836 = vadd.f32 %v354, %v835
        %v837 = vpop.f32.mrb[0].mxu0
        %v838 = vpop.f32.mrb[0].mxu0
        %v839 = vadd.f32 %v354, %v838
        %v840 = vpop.f32.mrb[0].mxu0
        %841 = vmatprep.mubr.bf16.mxu0 0
        %842 = vmatmul.mubr.bf16.gmra.mrb[0].mxu0 %v599
        %v843 = vpop.f32.mrb[0].mxu0
        %v844 = vadd.f32 %v354, %v843
        %v845 = vpop.f32.mrb[0].mxu0
        %v846 = vpop.f32.mrb[0].mxu0
        %v847 = vadd.f32 %v354, %v846
        %v848 = vpop.f32.mrb[0].mxu0
        %849 = vmatprep.mubr.bf16.mxu0 0
        %850 = vmatmul.mubr.bf16.gmra.mrb[0].mxu0 %v602
        %v851 = vpop.f32.mrb[0].mxu0
        %v852 = vadd.f32 %v354, %v851
        %v853 = vpop.f32.mrb[0].mxu0
        %v854 = vpop.f32.mrb[0].mxu0
        %v855 = vadd.f32 %v354, %v854
        %v856 = vpop.f32.mrb[0].mxu0
        %857 = vmatprep.mubr.bf16.mxu0 0
        %858 = vmatmul.mubr.bf16.gmra.mrb[0].mxu0 %v605
        %v859 = vpop.f32.mrb[0].mxu0
        %v860 = vadd.f32 %v354, %v859
        %v861 = vpop.f32.mrb[0].mxu0
        %v862 = vpop.f32.mrb[0].mxu0
        %v863 = vadd.f32 %v354, %v862
        %v864 = vpop.f32.mrb[0].mxu0
        %865 = vmatprep.mubr.bf16.mxu0 0
        %866 = vmatmul.mubr.bf16.gmra.mrb[0].mxu0 %v608
        %v867 = vpop.f32.mrb[0].mxu0
        %v868 = vadd.f32 %v354, %v867
        %v869 = vpop.f32.mrb[0].mxu0
        %v870 = vpop.f32.mrb[0].mxu0
        %v871 = vadd.f32 %v354, %v870
        %v872 = vpop.f32.mrb[0].mxu0
        %873 = vmatprep.mubr.bf16.mxu0 0
        %874 = vmatmul.mubr.bf16.gmra.mrb[0].mxu0 %v611
        %v875 = vpop.f32.mrb[0].mxu0
        %v876 = vadd.f32 %v354, %v875
        %v877 = vpop.f32.mrb[0].mxu0
        %v878 = vpop.f32.mrb[0].mxu0
        %v879 = vadd.f32 %v354, %v878
        %v880 = vpop.f32.mrb[0].mxu0
        %881 = vmatprep.mubr.bf16.mxu0 0
        %882 = vmatmul.mubr.bf16.gmra.mrb[0].mxu0 %v614
        %v883 = vpop.f32.mrb[0].mxu0
        %v884 = vadd.f32 %v354, %v883
        %v885 = vpop.f32.mrb[0].mxu0
        %v886 = vpop.f32.mrb[0].mxu0
        %v887 = vadd.f32 %v354, %v886
        %v888 = vpop.f32.mrb[0].mxu0
        %889 = vmatprep.mubr.bf16.mxu0 0
        %890 = vmatmul.mubr.bf16.gmra.mrb[0].mxu0 %v617
        %v891 = vpop.f32.mrb[0].mxu0
        %v892 = vadd.f32 %v354, %v891
        %v893 = vpop.f32.mrb[0].mxu0
        %v894 = vpop.f32.mrb[0].mxu0
        %v895 = vadd.f32 %v354, %v894
        %v896 = vpop.f32.mrb[0].mxu0
        %897 = vmatprep.mubr.bf16.mxu0 0
        %898 = vmatmul.mubr.bf16.gmra.mrb[0].mxu0 %v620
        %v899 = vpop.f32.mrb[0].mxu0
        %v900 = vadd.f32 %v354, %v899
        %v901 = vpop.f32.mrb[0].mxu0
        %v902 = vpop.f32.mrb[0].mxu0
        %v903 = vadd.f32 %v354, %v902
        %v904 = vpop.f32.mrb[0].mxu0
        %905 = vmatprep.mubr.bf16.mxu0 0
        %906 = vmatmul.mubr.bf16.gmra.mrb[0].mxu0 %v623
        %v907 = vpop.f32.mrb[0].mxu0
        %v908 = vadd.f32 %v354, %v907
        %v909 = vpop.f32.mrb[0].mxu0
        %v910 = vpop.f32.mrb[0].mxu0
        %v911 = vadd.f32 %v354, %v910
        %v912 = vpop.f32.mrb[0].mxu0
        %913 = vdwg.mxu0
        %v914 = vmax.f32 %v660, 0.0
        %v915 = vmax.f32 %v663, 0.0
        %v916 = vmax.f32 %v668, 0.0
        %v917 = vmax.f32 %v671, 0.0
        %v918 = vmax.f32 %v676, 0.0
        %v919 = vmax.f32 %v679, 0.0
        %v920 = vmax.f32 %v684, 0.0
        %v921 = vmax.f32 %v687, 0.0
        %v922 = vmax.f32 %v692, 0.0
        %v923 = vmax.f32 %v695, 0.0
        %v924 = vmax.f32 %v700, 0.0
        %v925 = vmax.f32 %v703, 0.0
        %v926 = vmax.f32 %v708, 0.0
        %v927 = vmax.f32 %v711, 0.0
        %v928 = vmax.f32 %v716, 0.0
        %v929 = vmax.f32 %v719, 0.0
        %v930 = vmax.f32 %v724, 0.0
        %v931 = vmax.f32 %v727, 0.0
        %v932 = vmax.f32 %v732, 0.0
        %v933 = vmax.f32 %v735, 0.0
        %v934 = vmax.f32 %v740, 0.0
        %v935 = vmax.f32 %v743, 0.0
        %v936 = vmax.f32 %v748, 0.0
        %v937 = vmax.f32 %v751, 0.0
        %v938 = vmax.f32 %v756, 0.0
        %v939 = vmax.f32 %v759, 0.0
        %v940 = vmax.f32 %v764, 0.0
        %v941 = vmax.f32 %v767, 0.0
        %v942 = vmax.f32 %v772, 0.0
        %v943 = vmax.f32 %v775, 0.0
        %v944 = vmax.f32 %v780, 0.0
        %v945 = vmax.f32 %v783, 0.0
        %v946 = vmax.f32 %v788, 0.0
        %v947 = vmax.f32 %v791, 0.0
        %v948 = vmax.f32 %v796, 0.0
        %v949 = vmax.f32 %v799, 0.0
        %v950 = vmax.f32 %v804, 0.0
        %v951 = vmax.f32 %v807, 0.0
        %v952 = vmax.f32 %v812, 0.0
        %v953 = vmax.f32 %v815, 0.0
        %v954 = vmax.f32 %v820, 0.0
        %v955 = vmax.f32 %v823, 0.0
        %v956 = vmax.f32 %v828, 0.0
        %v957 = vmax.f32 %v831, 0.0
        %v958 = vmax.f32 %v836, 0.0
        %v959 = vmax.f32 %v839, 0.0
        %v960 = vmax.f32 %v844, 0.0
        %v961 = vmax.f32 %v847, 0.0
        %v962 = vmax.f32 %v852, 0.0
        %v963 = vmax.f32 %v855, 0.0
        %v964 = vmax.f32 %v860, 0.0
        %v965 = vmax.f32 %v863, 0.0
        %v966 = vmax.f32 %v868, 0.0
        %v967 = vmax.f32 %v871, 0.0
        %v968 = vmax.f32 %v876, 0.0
        %v969 = vmax.f32 %v879, 0.0
        %v970 = vmax.f32 %v884, 0.0
        %v971 = vmax.f32 %v887, 0.0
        %v972 = vmax.f32 %v892, 0.0
        %v973 = vmax.f32 %v895, 0.0
        %v974 = vmax.f32 %v900, 0.0
        %v975 = vmax.f32 %v903, 0.0
        %v976 = vmax.f32 %v908, 0.0
        %v977 = vmax.f32 %v911, 0.0
        %v978 = vpack.c.bf16 %v915, %v914
        %v979 = vpack.c.bf16 %v917, %v916
        %v980 = vpack.c.bf16 %v919, %v918
        %v981 = vpack.c.bf16 %v921, %v920
        %v982 = vpack.c.bf16 %v923, %v922
        %v983 = vpack.c.bf16 %v925, %v924
        %v984 = vpack.c.bf16 %v927, %v926
        %v985 = vpack.c.bf16 %v929, %v928
        %v986 = vpack.c.bf16 %v931, %v930
        %v987 = vpack.c.bf16 %v933, %v932
        %v988 = vpack.c.bf16 %v935, %v934
        %v989 = vpack.c.bf16 %v937, %v936
        %v990 = vpack.c.bf16 %v939, %v938
        %v991 = vpack.c.bf16 %v941, %v940
        %v992 = vpack.c.bf16 %v943, %v942
        %v993 = vpack.c.bf16 %v945, %v944
        %v994 = vpack.c.bf16 %v947, %v946
        %v995 = vpack.c.bf16 %v949, %v948
        %v996 = vpack.c.bf16 %v951, %v950
        %v997 = vpack.c.bf16 %v953, %v952
        %v998 = vpack.c.bf16 %v955, %v954
        %v999 = vpack.c.bf16 %v957, %v956
        %v1000 = vpack.c.bf16 %v959, %v958
        %v1001 = vpack.c.bf16 %v961, %v960
        %v1002 = vpack.c.bf16 %v963, %v962
        %v1003 = vpack.c.bf16 %v965, %v964
        %v1004 = vpack.c.bf16 %v967, %v966
        %v1005 = vpack.c.bf16 %v969, %v968
        %v1006 = vpack.c.bf16 %v971, %v970
        %v1007 = vpack.c.bf16 %v973, %v972
        %v1008 = vpack.c.bf16 %v975, %v974
        %v1009 = vpack.c.bf16 %v977, %v976
        %v1010 = vld [vmem:[%s3] sm:$0xf]
        %v1011 = vld [vmem:[%s3 + $0x4] sm:$0xf]
        %v1012 = vld [vmem:[%s3 + $0x8] sm:$0xf]
        %v1013 = vld [vmem:[%s3 + $0xc] sm:$0xf]
        %v1014 = vld [vmem:[%s3 + $0x10] sm:$0xf]
        %v1015 = vld [vmem:[%s3 + $0x14] sm:$0xf]
        %v1016 = vld [vmem:[%s3 + $0x18] sm:$0xf]
        %v1017 = vld [vmem:[%s3 + $0x1c] sm:$0xf]
        %v1018 = vld [vmem:[%s3 + $0x20] sm:$0xf]
        %v1019 = vld [vmem:[%s3 + $0x24] sm:$0xf]
        %v1020 = vld [vmem:[%s3 + $0x28] sm:$0xf]
        %v1021 = vld [vmem:[%s3 + $0x2c] sm:$0xf]
        %v1022 = vld [vmem:[%s3 + $0x30] sm:$0xf]
        %v1023 = vld [vmem:[%s3 + $0x34] sm:$0xf]
        %v1024 = vld [vmem:[%s3 + $0x38] sm:$0xf]
        %v1025 = vld [vmem:[%s3 + $0x3c] sm:$0xf]
        %v1026 = vld [vmem:[%s4] sm:$0x1]
        %v1028 = vlaneseq
        %v1029 = vshrl.u32 %v1028, 7
        %v1030 = vsub.s32 0, %v1029
        %v1031 = vrot.slane %v1026, %v1030
        %v1049 = vunpack.c.l.b16 %v1010
        %v1050 = vunpack.c.l.b16 %v1011
        %v1051 = vunpack.c.l.b16 %v1012
        %v1052 = vunpack.c.l.b16 %v1013
        %v1053 = vunpack.c.l.b16 %v1014
        %v1054 = vunpack.c.l.b16 %v1015
        %v1055 = vunpack.c.l.b16 %v1016
        %v1056 = vunpack.c.l.b16 %v1017
        %v1057 = vunpack.c.l.b16 %v1018
        %v1058 = vunpack.c.l.b16 %v1019
        %v1059 = vunpack.c.l.b16 %v1020
        %v1060 = vunpack.c.l.b16 %v1021
        %v1061 = vunpack.c.l.b16 %v1022
        %v1062 = vunpack.c.l.b16 %v1023
        %v1063 = vunpack.c.l.b16 %v1024
        %v1064 = vunpack.c.l.b16 %v1025
        %v1065 = vpack.c.b16 %v1050, %v1049
        %v1066 = vpack.c.b16 %v1052, %v1051
        %v1067 = vpack.c.b16 %v1054, %v1053
        %v1068 = vpack.c.b16 %v1056, %v1055
        %v1069 = vpack.c.b16 %v1058, %v1057
        %v1070 = vpack.c.b16 %v1060, %v1059
        %v1071 = vpack.c.b16 %v1062, %v1061
        %v1072 = vpack.c.b16 %v1064, %v1063
        %1081 = vmatprep.subr.bf16.mxu0 0
        %1082 = vmatpush1.bf16.msra.mxu0 %v1065
        %1083 = vmatprep.subr.bf16.mxu0 0
        %1084 = vmatpush1.bf16.msra.mxu0 %v1066
        %1085 = vmatprep.subr.bf16.mxu0 0
        %1086 = vmatpush1.bf16.msra.mxu0 %v1067
        %1087 = vmatprep.subr.bf16.mxu0 0
        %1088 = vmatpush1.bf16.msra.mxu0 %v1068
        %1089 = vmatprep.subr.bf16.mxu0 0
        %1090 = vmatpush1.bf16.msra.mxu0 %v1069
        %1091 = vmatprep.subr.bf16.mxu0 0
        %1092 = vmatpush1.bf16.msra.mxu0 %v1070
        %1093 = vmatprep.subr.bf16.mxu0 0
        %1094 = vmatpush1.bf16.msra.mxu0 %v1071
        %1095 = vmatprep.subr.bf16.mxu0 0
        %1096 = vmatpush1.bf16.msra.mxu0 %v1072
        %1097 = vmatprep.subr.bf16.mxu0 0
        %1098 = vmatpush1.bf16.msra.mxu0 0
        %1099 = vmatprep.subr.bf16.mxu0 0
        %1100 = vmatpush1.bf16.msra.mxu0 0
        %1101 = vmatprep.subr.bf16.mxu0 0
        %1102 = vmatpush1.bf16.msra.mxu0 0
        %1103 = vmatprep.subr.bf16.mxu0 0
        %1104 = vmatpush1.bf16.msra.mxu0 0
        %1105 = vmatprep.subr.bf16.mxu0 0
        %1106 = vmatpush1.bf16.msra.mxu0 0
        %1107 = vmatprep.subr.bf16.mxu0 0
        %1108 = vmatpush1.bf16.msra.mxu0 0
        %1109 = vmatprep.subr.bf16.mxu0 0
        %1110 = vmatpush1.bf16.msra.mxu0 0
        %1111 = vmatprep.subr.bf16.mxu0 0
        %1112 = vmatpush1.bf16.msra.mxu0 0
        %1113 = vmatprep.mubr.bf16.mxu0 0
        %1114 = vmatmul.mubr.bf16.gmra.mrb[0].mxu0 %v978
        %v1115 = vpop.f32.mrb[0].mxu0
        %v1116 = vadd.f32 %v1031, %v1115
        %v1117 = vpop.f32.mrb[0].mxu0
        %v1118 = vpop.f32.mrb[0].mxu0
        %v1119 = vadd.f32 %v1031, %v1118
        %v1120 = vpop.f32.mrb[0].mxu0
        %1121 = vmatprep.mubr.bf16.mxu0 0
        %1122 = vmatmul.mubr.bf16.gmra.mrb[0].mxu0 %v979
        %v1123 = vpop.f32.mrb[0].mxu0
        %v1124 = vadd.f32 %v1031, %v1123
        %v1125 = vpop.f32.mrb[0].mxu0
        %v1126 = vpop.f32.mrb[0].mxu0
        %v1127 = vadd.f32 %v1031, %v1126
        %v1128 = vpop.f32.mrb[0].mxu0
        %1129 = vmatprep.mubr.bf16.mxu0 0
        %1130 = vmatmul.mubr.bf16.gmra.mrb[0].mxu0 %v980
        %v1131 = vpop.f32.mrb[0].mxu0
        %v1132 = vadd.f32 %v1031, %v1131
        %v1133 = vpop.f32.mrb[0].mxu0
        %v1134 = vpop.f32.mrb[0].mxu0
        %v1135 = vadd.f32 %v1031, %v1134
        %v1136 = vpop.f32.mrb[0].mxu0
        %1137 = vmatprep.mubr.bf16.mxu0 0
        %1138 = vmatmul.mubr.bf16.gmra.mrb[0].mxu0 %v981
        %v1139 = vpop.f32.mrb[0].mxu0
        %v1140 = vadd.f32 %v1031, %v1139
        %v1141 = vpop.f32.mrb[0].mxu0
        %v1142 = vpop.f32.mrb[0].mxu0
        %v1143 = vadd.f32 %v1031, %v1142
        %v1144 = vpop.f32.mrb[0].mxu0
        %1145 = vmatprep.mubr.bf16.mxu0 0
        %1146 = vmatmul.mubr.bf16.gmra.mrb[0].mxu0 %v982
        %v1147 = vpop.f32.mrb[0].mxu0
        %v1148 = vadd.f32 %v1031, %v1147
        %v1149 = vpop.f32.mrb[0].mxu0
        %v1150 = vpop.f32.mrb[0].mxu0
        %v1151 = vadd.f32 %v1031, %v1150
        %v1152 = vpop.f32.mrb[0].mxu0
        %1153 = vmatprep.mubr.bf16.mxu0 0
        %1154 = vmatmul.mubr.bf16.gmra.mrb[0].mxu0 %v983
        %v1155 = vpop.f32.mrb[0].mxu0
        %v1156 = vadd.f32 %v1031, %v1155
        %v1157 = vpop.f32.mrb[0].mxu0
        %v1158 = vpop.f32.mrb[0].mxu0
        %v1159 = vadd.f32 %v1031, %v1158
        %v1160 = vpop.f32.mrb[0].mxu0
        %1161 = vmatprep.mubr.bf16.mxu0 0
        %1162 = vmatmul.mubr.bf16.gmra.mrb[0].mxu0 %v984
        %v1163 = vpop.f32.mrb[0].mxu0
        %v1164 = vadd.f32 %v1031, %v1163
        %v1165 = vpop.f32.mrb[0].mxu0
        %v1166 = vpop.f32.mrb[0].mxu0
        %v1167 = vadd.f32 %v1031, %v1166
        %v1168 = vpop.f32.mrb[0].mxu0
        %1169 = vmatprep.mubr.bf16.mxu0 0
        %1170 = vmatmul.mubr.bf16.gmra.mrb[0].mxu0 %v985
        %v1171 = vpop.f32.mrb[0].mxu0
        %v1172 = vadd.f32 %v1031, %v1171
        %v1173 = vpop.f32.mrb[0].mxu0
        %v1174 = vpop.f32.mrb[0].mxu0
        %v1175 = vadd.f32 %v1031, %v1174
        %v1176 = vpop.f32.mrb[0].mxu0
        %1177 = vmatprep.mubr.bf16.mxu0 0
        %1178 = vmatmul.mubr.bf16.gmra.mrb[0].mxu0 %v986
        %v1179 = vpop.f32.mrb[0].mxu0
        %v1180 = vadd.f32 %v1031, %v1179
        %v1181 = vpop.f32.mrb[0].mxu0
        %v1182 = vpop.f32.mrb[0].mxu0
        %v1183 = vadd.f32 %v1031, %v1182
        %v1184 = vpop.f32.mrb[0].mxu0
        %1185 = vmatprep.mubr.bf16.mxu0 0
        %1186 = vmatmul.mubr.bf16.gmra.mrb[0].mxu0 %v987
        %v1187 = vpop.f32.mrb[0].mxu0
        %v1188 = vadd.f32 %v1031, %v1187
        %v1189 = vpop.f32.mrb[0].mxu0
        %v1190 = vpop.f32.mrb[0].mxu0
        %v1191 = vadd.f32 %v1031, %v1190
        %v1192 = vpop.f32.mrb[0].mxu0
        %1193 = vmatprep.mubr.bf16.mxu0 0
        %1194 = vmatmul.mubr.bf16.gmra.mrb[0].mxu0 %v988
        %v1195 = vpop.f32.mrb[0].mxu0
        %v1196 = vadd.f32 %v1031, %v1195
        %v1197 = vpop.f32.mrb[0].mxu0
        %v1198 = vpop.f32.mrb[0].mxu0
        %v1199 = vadd.f32 %v1031, %v1198
        %v1200 = vpop.f32.mrb[0].mxu0
        %1201 = vmatprep.mubr.bf16.mxu0 0
        %1202 = vmatmul.mubr.bf16.gmra.mrb[0].mxu0 %v989
        %v1203 = vpop.f32.mrb[0].mxu0
        %v1204 = vadd.f32 %v1031, %v1203
        %v1205 = vpop.f32.mrb[0].mxu0
        %v1206 = vpop.f32.mrb[0].mxu0
        %v1207 = vadd.f32 %v1031, %v1206
        %v1208 = vpop.f32.mrb[0].mxu0
        %1209 = vmatprep.mubr.bf16.mxu0 0
        %1210 = vmatmul.mubr.bf16.gmra.mrb[0].mxu0 %v990
        %v1211 = vpop.f32.mrb[0].mxu0
        %v1212 = vadd.f32 %v1031, %v1211
        %v1213 = vpop.f32.mrb[0].mxu0
        %v1214 = vpop.f32.mrb[0].mxu0
        %v1215 = vadd.f32 %v1031, %v1214
        %v1216 = vpop.f32.mrb[0].mxu0
        %1217 = vmatprep.mubr.bf16.mxu0 0
        %1218 = vmatmul.mubr.bf16.gmra.mrb[0].mxu0 %v991
        %v1219 = vpop.f32.mrb[0].mxu0
        %v1220 = vadd.f32 %v1031, %v1219
        %v1221 = vpop.f32.mrb[0].mxu0
        %v1222 = vpop.f32.mrb[0].mxu0
        %v1223 = vadd.f32 %v1031, %v1222
        %v1224 = vpop.f32.mrb[0].mxu0
        %1225 = vmatprep.mubr.bf16.mxu0 0
        %1226 = vmatmul.mubr.bf16.gmra.mrb[0].mxu0 %v992
        %v1227 = vpop.f32.mrb[0].mxu0
        %v1228 = vadd.f32 %v1031, %v1227
        %v1229 = vpop.f32.mrb[0].mxu0
        %v1230 = vpop.f32.mrb[0].mxu0
        %v1231 = vadd.f32 %v1031, %v1230
        %v1232 = vpop.f32.mrb[0].mxu0
        %1233 = vmatprep.mubr.bf16.mxu0 0
        %1234 = vmatmul.mubr.bf16.gmra.mrb[0].mxu0 %v993
        %v1235 = vpop.f32.mrb[0].mxu0
        %v1236 = vadd.f32 %v1031, %v1235
        %v1237 = vpop.f32.mrb[0].mxu0
        %v1238 = vpop.f32.mrb[0].mxu0
        %v1239 = vadd.f32 %v1031, %v1238
        %v1240 = vpop.f32.mrb[0].mxu0
        %1241 = vmatprep.mubr.bf16.mxu0 0
        %1242 = vmatmul.mubr.bf16.gmra.mrb[0].mxu0 %v994
        %v1243 = vpop.f32.mrb[0].mxu0
        %v1244 = vadd.f32 %v1031, %v1243
        %v1245 = vpop.f32.mrb[0].mxu0
        %v1246 = vpop.f32.mrb[0].mxu0
        %v1247 = vadd.f32 %v1031, %v1246
        %v1248 = vpop.f32.mrb[0].mxu0
        %1249 = vmatprep.mubr.bf16.mxu0 0
        %1250 = vmatmul.mubr.bf16.gmra.mrb[0].mxu0 %v995
        %v1251 = vpop.f32.mrb[0].mxu0
        %v1252 = vadd.f32 %v1031, %v1251
        %v1253 = vpop.f32.mrb[0].mxu0
        %v1254 = vpop.f32.mrb[0].mxu0
        %v1255 = vadd.f32 %v1031, %v1254
        %v1256 = vpop.f32.mrb[0].mxu0
        %1257 = vmatprep.mubr.bf16.mxu0 0
        %1258 = vmatmul.mubr.bf16.gmra.mrb[0].mxu0 %v996
        %v1259 = vpop.f32.mrb[0].mxu0
        %v1260 = vadd.f32 %v1031, %v1259
        %v1261 = vpop.f32.mrb[0].mxu0
        %v1262 = vpop.f32.mrb[0].mxu0
        %v1263 = vadd.f32 %v1031, %v1262
        %v1264 = vpop.f32.mrb[0].mxu0
        %1265 = vmatprep.mubr.bf16.mxu0 0
        %1266 = vmatmul.mubr.bf16.gmra.mrb[0].mxu0 %v997
        %v1267 = vpop.f32.mrb[0].mxu0
        %v1268 = vadd.f32 %v1031, %v1267
        %v1269 = vpop.f32.mrb[0].mxu0
        %v1270 = vpop.f32.mrb[0].mxu0
        %v1271 = vadd.f32 %v1031, %v1270
        %v1272 = vpop.f32.mrb[0].mxu0
        %1273 = vmatprep.mubr.bf16.mxu0 0
        %1274 = vmatmul.mubr.bf16.gmra.mrb[0].mxu0 %v998
        %v1275 = vpop.f32.mrb[0].mxu0
        %v1276 = vadd.f32 %v1031, %v1275
        %v1277 = vpop.f32.mrb[0].mxu0
        %v1278 = vpop.f32.mrb[0].mxu0
        %v1279 = vadd.f32 %v1031, %v1278
        %v1280 = vpop.f32.mrb[0].mxu0
        %1281 = vmatprep.mubr.bf16.mxu0 0
        %1282 = vmatmul.mubr.bf16.gmra.mrb[0].mxu0 %v999
        %v1283 = vpop.f32.mrb[0].mxu0
        %v1284 = vadd.f32 %v1031, %v1283
        %v1285 = vpop.f32.mrb[0].mxu0
        %v1286 = vpop.f32.mrb[0].mxu0
        %v1287 = vadd.f32 %v1031, %v1286
        %v1288 = vpop.f32.mrb[0].mxu0
        %1289 = vmatprep.mubr.bf16.mxu0 0
        %1290 = vmatmul.mubr.bf16.gmra.mrb[0].mxu0 %v1000
        %v1291 = vpop.f32.mrb[0].mxu0
        %v1292 = vadd.f32 %v1031, %v1291
        %v1293 = vpop.f32.mrb[0].mxu0
        %v1294 = vpop.f32.mrb[0].mxu0
        %v1295 = vadd.f32 %v1031, %v1294
        %v1296 = vpop.f32.mrb[0].mxu0
        %1297 = vmatprep.mubr.bf16.mxu0 0
        %1298 = vmatmul.mubr.bf16.gmra.mrb[0].mxu0 %v1001
        %v1299 = vpop.f32.mrb[0].mxu0
        %v1300 = vadd.f32 %v1031, %v1299
        %v1301 = vpop.f32.mrb[0].mxu0
        %v1302 = vpop.f32.mrb[0].mxu0
        %v1303 = vadd.f32 %v1031, %v1302
        %v1304 = vpop.f32.mrb[0].mxu0
        %1305 = vmatprep.mubr.bf16.mxu0 0
        %1306 = vmatmul.mubr.bf16.gmra.mrb[0].mxu0 %v1002
        %v1307 = vpop.f32.mrb[0].mxu0
        %v1308 = vadd.f32 %v1031, %v1307
        %v1309 = vpop.f32.mrb[0].mxu0
        %v1310 = vpop.f32.mrb[0].mxu0
        %v1311 = vadd.f32 %v1031, %v1310
        %v1312 = vpop.f32.mrb[0].mxu0
        %1313 = vmatprep.mubr.bf16.mxu0 0
        %1314 = vmatmul.mubr.bf16.gmra.mrb[0].mxu0 %v1003
        %v1315 = vpop.f32.mrb[0].mxu0
        %v1316 = vadd.f32 %v1031, %v1315
        %v1317 = vpop.f32.mrb[0].mxu0
        %v1318 = vpop.f32.mrb[0].mxu0
        %v1319 = vadd.f32 %v1031, %v1318
        %v1320 = vpop.f32.mrb[0].mxu0
        %1321 = vmatprep.mubr.bf16.mxu0 0
        %1322 = vmatmul.mubr.bf16.gmra.mrb[0].mxu0 %v1004
        %v1323 = vpop.f32.mrb[0].mxu0
        %v1324 = vadd.f32 %v1031, %v1323
        %v1325 = vpop.f32.mrb[0].mxu0
        %v1326 = vpop.f32.mrb[0].mxu0
        %v1327 = vadd.f32 %v1031, %v1326
        %v1328 = vpop.f32.mrb[0].mxu0
        %1329 = vmatprep.mubr.bf16.mxu0 0
        %1330 = vmatmul.mubr.bf16.gmra.mrb[0].mxu0 %v1005
        %v1331 = vpop.f32.mrb[0].mxu0
        %v1332 = vadd.f32 %v1031, %v1331
        %v1333 = vpop.f32.mrb[0].mxu0
        %v1334 = vpop.f32.mrb[0].mxu0
        %v1335 = vadd.f32 %v1031, %v1334
        %v1336 = vpop.f32.mrb[0].mxu0
        %1337 = vmatprep.mubr.bf16.mxu0 0
        %1338 = vmatmul.mubr.bf16.gmra.mrb[0].mxu0 %v1006
        %v1339 = vpop.f32.mrb[0].mxu0
        %v1340 = vadd.f32 %v1031, %v1339
        %v1341 = vpop.f32.mrb[0].mxu0
        %v1342 = vpop.f32.mrb[0].mxu0
        %v1343 = vadd.f32 %v1031, %v1342
        %v1344 = vpop.f32.mrb[0].mxu0
        %1345 = vmatprep.mubr.bf16.mxu0 0
        %1346 = vmatmul.mubr.bf16.gmra.mrb[0].mxu0 %v1007
        %v1347 = vpop.f32.mrb[0].mxu0
        %v1348 = vadd.f32 %v1031, %v1347
        %v1349 = vpop.f32.mrb[0].mxu0
        %v1350 = vpop.f32.mrb[0].mxu0
        %v1351 = vadd.f32 %v1031, %v1350
        %v1352 = vpop.f32.mrb[0].mxu0
        %1353 = vmatprep.mubr.bf16.mxu0 0
        %1354 = vmatmul.mubr.bf16.gmra.mrb[0].mxu0 %v1008
        %v1355 = vpop.f32.mrb[0].mxu0
        %v1356 = vadd.f32 %v1031, %v1355
        %v1357 = vpop.f32.mrb[0].mxu0
        %v1358 = vpop.f32.mrb[0].mxu0
        %v1359 = vadd.f32 %v1031, %v1358
        %v1360 = vpop.f32.mrb[0].mxu0
        %1361 = vmatprep.mubr.bf16.mxu0 0
        %1362 = vmatmul.mubr.bf16.gmra.mrb[0].mxu0 %v1009
        %v1363 = vpop.f32.mrb[0].mxu0
        %v1364 = vadd.f32 %v1031, %v1363
        %v1365 = vpop.f32.mrb[0].mxu0
        %v1366 = vpop.f32.mrb[0].mxu0
        %v1367 = vadd.f32 %v1031, %v1366
        %v1368 = vpop.f32.mrb[0].mxu0
        %1369 = vdwg.mxu0
        %v1370 = vmax.f32 %v1116, 0.0
        %v1371 = vmax.f32 %v1119, 0.0
        %v1372 = vmax.f32 %v1124, 0.0
        %v1373 = vmax.f32 %v1127, 0.0
        %v1374 = vmax.f32 %v1132, 0.0
        %v1375 = vmax.f32 %v1135, 0.0
        %v1376 = vmax.f32 %v1140, 0.0
        %v1377 = vmax.f32 %v1143, 0.0
        %v1378 = vmax.f32 %v1148, 0.0
        %v1379 = vmax.f32 %v1151, 0.0
        %v1380 = vmax.f32 %v1156, 0.0
        %v1381 = vmax.f32 %v1159, 0.0
        %v1382 = vmax.f32 %v1164, 0.0
        %v1383 = vmax.f32 %v1167, 0.0
        %v1384 = vmax.f32 %v1172, 0.0
        %v1385 = vmax.f32 %v1175, 0.0
        %v1386 = vmax.f32 %v1180, 0.0
        %v1387 = vmax.f32 %v1183, 0.0
        %v1388 = vmax.f32 %v1188, 0.0
        %v1389 = vmax.f32 %v1191, 0.0
        %v1390 = vmax.f32 %v1196, 0.0
        %v1391 = vmax.f32 %v1199, 0.0
        %v1392 = vmax.f32 %v1204, 0.0
        %v1393 = vmax.f32 %v1207, 0.0
        %v1394 = vmax.f32 %v1212, 0.0
        %v1395 = vmax.f32 %v1215, 0.0
        %v1396 = vmax.f32 %v1220, 0.0
        %v1397 = vmax.f32 %v1223, 0.0
        %v1398 = vmax.f32 %v1228, 0.0
        %v1399 = vmax.f32 %v1231, 0.0
        %v1400 = vmax.f32 %v1236, 0.0
        %v1401 = vmax.f32 %v1239, 0.0
        %v1402 = vmax.f32 %v1244, 0.0
        %v1403 = vmax.f32 %v1247, 0.0
        %v1404 = vmax.f32 %v1252, 0.0
        %v1405 = vmax.f32 %v1255, 0.0
        %v1406 = vmax.f32 %v1260, 0.0
        %v1407 = vmax.f32 %v1263, 0.0
        %v1408 = vmax.f32 %v1268, 0.0
        %v1409 = vmax.f32 %v1271, 0.0
        %v1410 = vmax.f32 %v1276, 0.0
        %v1411 = vmax.f32 %v1279, 0.0
        %v1412 = vmax.f32 %v1284, 0.0
        %v1413 = vmax.f32 %v1287, 0.0
        %v1414 = vmax.f32 %v1292, 0.0
        %v1415 = vmax.f32 %v1295, 0.0
        %v1416 = vmax.f32 %v1300, 0.0
        %v1417 = vmax.f32 %v1303, 0.0
        %v1418 = vmax.f32 %v1308, 0.0
        %v1419 = vmax.f32 %v1311, 0.0
        %v1420 = vmax.f32 %v1316, 0.0
        %v1421 = vmax.f32 %v1319, 0.0
        %v1422 = vmax.f32 %v1324, 0.0
        %v1423 = vmax.f32 %v1327, 0.0
        %v1424 = vmax.f32 %v1332, 0.0
        %v1425 = vmax.f32 %v1335, 0.0
        %v1426 = vmax.f32 %v1340, 0.0
        %v1427 = vmax.f32 %v1343, 0.0
        %v1428 = vmax.f32 %v1348, 0.0
        %v1429 = vmax.f32 %v1351, 0.0
        %v1430 = vmax.f32 %v1356, 0.0
        %v1431 = vmax.f32 %v1359, 0.0
        %v1432 = vmax.f32 %v1364, 0.0
        %v1433 = vmax.f32 %v1367, 0.0
        %v1434 = vpack.c.bf16 %v1371, %v1370
        %v1435 = vpack.c.bf16 %v1373, %v1372
        %v1436 = vpack.c.bf16 %v1375, %v1374
        %v1437 = vpack.c.bf16 %v1377, %v1376
        %v1438 = vpack.c.bf16 %v1379, %v1378
        %v1439 = vpack.c.bf16 %v1381, %v1380
        %v1440 = vpack.c.bf16 %v1383, %v1382
        %v1441 = vpack.c.bf16 %v1385, %v1384
        %v1442 = vpack.c.bf16 %v1387, %v1386
        %v1443 = vpack.c.bf16 %v1389, %v1388
        %v1444 = vpack.c.bf16 %v1391, %v1390
        %v1445 = vpack.c.bf16 %v1393, %v1392
        %v1446 = vpack.c.bf16 %v1395, %v1394
        %v1447 = vpack.c.bf16 %v1397, %v1396
        %v1448 = vpack.c.bf16 %v1399, %v1398
        %v1449 = vpack.c.bf16 %v1401, %v1400
        %v1450 = vpack.c.bf16 %v1403, %v1402
        %v1451 = vpack.c.bf16 %v1405, %v1404
        %v1452 = vpack.c.bf16 %v1407, %v1406
        %v1453 = vpack.c.bf16 %v1409, %v1408
        %v1454 = vpack.c.bf16 %v1411, %v1410
        %v1455 = vpack.c.bf16 %v1413, %v1412
        %v1456 = vpack.c.bf16 %v1415, %v1414
        %v1457 = vpack.c.bf16 %v1417, %v1416
        %v1458 = vpack.c.bf16 %v1419, %v1418
        %v1459 = vpack.c.bf16 %v1421, %v1420
        %v1460 = vpack.c.bf16 %v1423, %v1422
        %v1461 = vpack.c.bf16 %v1425, %v1424
        %v1462 = vpack.c.bf16 %v1427, %v1426
        %v1463 = vpack.c.bf16 %v1429, %v1428
        %v1464 = vpack.c.bf16 %v1431, %v1430
        %v1465 = vpack.c.bf16 %v1433, %v1432
        %v1466 = vld [vmem:[%s5] sm:$0xf]
        %v1467 = vld [vmem:[%s5 + $0x4] sm:$0xf]
        %v1468 = vld [vmem:[%s5 + $0x8] sm:$0xf]
        %v1469 = vld [vmem:[%s5 + $0xc] sm:$0xf]
        %v1470 = vld [vmem:[%s5 + $0x10] sm:$0xf]
        %v1471 = vld [vmem:[%s5 + $0x14] sm:$0xf]
        %v1472 = vld [vmem:[%s5 + $0x18] sm:$0xf]
        %v1473 = vld [vmem:[%s5 + $0x1c] sm:$0xf]
        %v1474 = vld [vmem:[%s5 + $0x20] sm:$0xf]
        %v1475 = vld [vmem:[%s5 + $0x24] sm:$0xf]
        %v1476 = vld [vmem:[%s5 + $0x28] sm:$0xf]
        %v1477 = vld [vmem:[%s5 + $0x2c] sm:$0xf]
        %v1478 = vld [vmem:[%s5 + $0x30] sm:$0xf]
        %v1479 = vld [vmem:[%s5 + $0x34] sm:$0xf]
        %v1480 = vld [vmem:[%s5 + $0x38] sm:$0xf]
        %v1481 = vld [vmem:[%s5 + $0x3c] sm:$0xf]
        %v1482 = vld [vmem:[%s6] sm:$0x1]
        %v1484 = vlaneseq
        %v1485 = vshrl.u32 %v1484, 7
        %v1486 = vsub.s32 0, %v1485
        %v1487 = vrot.slane %v1482, %v1486
        %v1505 = vunpack.c.l.b16 %v1466
        %v1506 = vunpack.c.l.b16 %v1467
        %v1507 = vunpack.c.l.b16 %v1468
        %v1508 = vunpack.c.l.b16 %v1469
        %v1509 = vunpack.c.l.b16 %v1470
        %v1510 = vunpack.c.l.b16 %v1471
        %v1511 = vunpack.c.l.b16 %v1472
        %v1512 = vunpack.c.l.b16 %v1473
        %v1513 = vunpack.c.l.b16 %v1474
        %v1514 = vunpack.c.l.b16 %v1475
        %v1515 = vunpack.c.l.b16 %v1476
        %v1516 = vunpack.c.l.b16 %v1477
        %v1517 = vunpack.c.l.b16 %v1478
        %v1518 = vunpack.c.l.b16 %v1479
        %v1519 = vunpack.c.l.b16 %v1480
        %v1520 = vunpack.c.l.b16 %v1481
        %v1521 = vpack.c.b16 %v1506, %v1505
        %v1522 = vpack.c.b16 %v1508, %v1507
        %v1523 = vpack.c.b16 %v1510, %v1509
        %v1524 = vpack.c.b16 %v1512, %v1511
        %v1525 = vpack.c.b16 %v1514, %v1513
        %v1526 = vpack.c.b16 %v1516, %v1515
        %v1527 = vpack.c.b16 %v1518, %v1517
        %v1528 = vpack.c.b16 %v1520, %v1519
        %1537 = vmatprep.subr.bf16.mxu0 0
        %1538 = vmatpush1.bf16.msra.mxu0 %v1521
        %1539 = vmatprep.subr.bf16.mxu0 0
        %1540 = vmatpush1.bf16.msra.mxu0 %v1522
        %1541 = vmatprep.subr.bf16.mxu0 0
        %1542 = vmatpush1.bf16.msra.mxu0 %v1523
        %1543 = vmatprep.subr.bf16.mxu0 0
        %1544 = vmatpush1.bf16.msra.mxu0 %v1524
        %1545 = vmatprep.subr.bf16.mxu0 0
        %1546 = vmatpush1.bf16.msra.mxu0 %v1525
        %1547 = vmatprep.subr.bf16.mxu0 0
        %1548 = vmatpush1.bf16.msra.mxu0 %v1526
        %1549 = vmatprep.subr.bf16.mxu0 0
        %1550 = vmatpush1.bf16.msra.mxu0 %v1527
        %1551 = vmatprep.subr.bf16.mxu0 0
        %1552 = vmatpush1.bf16.msra.mxu0 %v1528
        %1553 = vmatprep.subr.bf16.mxu0 0
        %1554 = vmatpush1.bf16.msra.mxu0 0
        %1555 = vmatprep.subr.bf16.mxu0 0
        %1556 = vmatpush1.bf16.msra.mxu0 0
        %1557 = vmatprep.subr.bf16.mxu0 0
        %1558 = vmatpush1.bf16.msra.mxu0 0
        %1559 = vmatprep.subr.bf16.mxu0 0
        %1560 = vmatpush1.bf16.msra.mxu0 0
        %1561 = vmatprep.subr.bf16.mxu0 0
        %1562 = vmatpush1.bf16.msra.mxu0 0
        %1563 = vmatprep.subr.bf16.mxu0 0
        %1564 = vmatpush1.bf16.msra.mxu0 0
        %1565 = vmatprep.subr.bf16.mxu0 0
        %1566 = vmatpush1.bf16.msra.mxu0 0
        %1567 = vmatprep.subr.bf16.mxu0 0
        %1568 = vmatpush1.bf16.msra.mxu0 0
        %1569 = vmatprep.mubr.bf16.mxu0 0
        %1570 = vmatmul.mubr.bf16.gmra.mrb[0].mxu0 %v1434
        %v1571 = vpop.f32.mrb[0].mxu0
        %v1572 = vadd.f32 %v1487, %v1571
        %v1573 = vpop.f32.mrb[0].mxu0
        %v1574 = vpop.f32.mrb[0].mxu0
        %v1575 = vadd.f32 %v1487, %v1574
        %v1576 = vpop.f32.mrb[0].mxu0
        %1577 = vmatprep.mubr.bf16.mxu0 0
        %1578 = vmatmul.mubr.bf16.gmra.mrb[0].mxu0 %v1435
        %v1579 = vpop.f32.mrb[0].mxu0
        %v1580 = vadd.f32 %v1487, %v1579
        %v1581 = vpop.f32.mrb[0].mxu0
        %v1582 = vpop.f32.mrb[0].mxu0
        %v1583 = vadd.f32 %v1487, %v1582
        %v1584 = vpop.f32.mrb[0].mxu0
        %1585 = vmatprep.mubr.bf16.mxu0 0
        %1586 = vmatmul.mubr.bf16.gmra.mrb[0].mxu0 %v1436
        %v1587 = vpop.f32.mrb[0].mxu0
        %v1588 = vadd.f32 %v1487, %v1587
        %v1589 = vpop.f32.mrb[0].mxu0
        %v1590 = vpop.f32.mrb[0].mxu0
        %v1591 = vadd.f32 %v1487, %v1590
        %v1592 = vpop.f32.mrb[0].mxu0
        %1593 = vmatprep.mubr.bf16.mxu0 0
        %1594 = vmatmul.mubr.bf16.gmra.mrb[0].mxu0 %v1437
        %v1595 = vpop.f32.mrb[0].mxu0
        %v1596 = vadd.f32 %v1487, %v1595
        %v1597 = vpop.f32.mrb[0].mxu0
        %v1598 = vpop.f32.mrb[0].mxu0
        %v1599 = vadd.f32 %v1487, %v1598
        %v1600 = vpop.f32.mrb[0].mxu0
        %1601 = vmatprep.mubr.bf16.mxu0 0
        %1602 = vmatmul.mubr.bf16.gmra.mrb[0].mxu0 %v1438
        %v1603 = vpop.f32.mrb[0].mxu0
        %v1604 = vadd.f32 %v1487, %v1603
        %v1605 = vpop.f32.mrb[0].mxu0
        %v1606 = vpop.f32.mrb[0].mxu0
        %v1607 = vadd.f32 %v1487, %v1606
        %v1608 = vpop.f32.mrb[0].mxu0
        %1609 = vmatprep.mubr.bf16.mxu0 0
        %1610 = vmatmul.mubr.bf16.gmra.mrb[0].mxu0 %v1439
        %v1611 = vpop.f32.mrb[0].mxu0
        %v1612 = vadd.f32 %v1487, %v1611
        %v1613 = vpop.f32.mrb[0].mxu0
        %v1614 = vpop.f32.mrb[0].mxu0
        %v1615 = vadd.f32 %v1487, %v1614
        %v1616 = vpop.f32.mrb[0].mxu0
        %1617 = vmatprep.mubr.bf16.mxu0 0
        %1618 = vmatmul.mubr.bf16.gmra.mrb[0].mxu0 %v1440
        %v1619 = vpop.f32.mrb[0].mxu0
        %v1620 = vadd.f32 %v1487, %v1619
        %v1621 = vpop.f32.mrb[0].mxu0
        %v1622 = vpop.f32.mrb[0].mxu0
        %v1623 = vadd.f32 %v1487, %v1622
        %v1624 = vpop.f32.mrb[0].mxu0
        %1625 = vmatprep.mubr.bf16.mxu0 0
        %1626 = vmatmul.mubr.bf16.gmra.mrb[0].mxu0 %v1441
        %v1627 = vpop.f32.mrb[0].mxu0
        %v1628 = vadd.f32 %v1487, %v1627
        %v1629 = vpop.f32.mrb[0].mxu0
        %v1630 = vpop.f32.mrb[0].mxu0
        %v1631 = vadd.f32 %v1487, %v1630
        %v1632 = vpop.f32.mrb[0].mxu0
        %1633 = vmatprep.mubr.bf16.mxu0 0
        %1634 = vmatmul.mubr.bf16.gmra.mrb[0].mxu0 %v1442
        %v1635 = vpop.f32.mrb[0].mxu0
        %v1636 = vadd.f32 %v1487, %v1635
        %v1637 = vpop.f32.mrb[0].mxu0
        %v1638 = vpop.f32.mrb[0].mxu0
        %v1639 = vadd.f32 %v1487, %v1638
        %v1640 = vpop.f32.mrb[0].mxu0
        %1641 = vmatprep.mubr.bf16.mxu0 0
        %1642 = vmatmul.mubr.bf16.gmra.mrb[0].mxu0 %v1443
        %v1643 = vpop.f32.mrb[0].mxu0
        %v1644 = vadd.f32 %v1487, %v1643
        %v1645 = vpop.f32.mrb[0].mxu0
        %v1646 = vpop.f32.mrb[0].mxu0
        %v1647 = vadd.f32 %v1487, %v1646
        %v1648 = vpop.f32.mrb[0].mxu0
        %1649 = vmatprep.mubr.bf16.mxu0 0
        %1650 = vmatmul.mubr.bf16.gmra.mrb[0].mxu0 %v1444
        %v1651 = vpop.f32.mrb[0].mxu0
        %v1652 = vadd.f32 %v1487, %v1651
        %v1653 = vpop.f32.mrb[0].mxu0
        %v1654 = vpop.f32.mrb[0].mxu0
        %v1655 = vadd.f32 %v1487, %v1654
        %v1656 = vpop.f32.mrb[0].mxu0
        %1657 = vmatprep.mubr.bf16.mxu0 0
        %1658 = vmatmul.mubr.bf16.gmra.mrb[0].mxu0 %v1445
        %v1659 = vpop.f32.mrb[0].mxu0
        %v1660 = vadd.f32 %v1487, %v1659
        %v1661 = vpop.f32.mrb[0].mxu0
        %v1662 = vpop.f32.mrb[0].mxu0
        %v1663 = vadd.f32 %v1487, %v1662
        %v1664 = vpop.f32.mrb[0].mxu0
        %1665 = vmatprep.mubr.bf16.mxu0 0
        %1666 = vmatmul.mubr.bf16.gmra.mrb[0].mxu0 %v1446
        %v1667 = vpop.f32.mrb[0].mxu0
        %v1668 = vadd.f32 %v1487, %v1667
        %v1669 = vpop.f32.mrb[0].mxu0
        %v1670 = vpop.f32.mrb[0].mxu0
        %v1671 = vadd.f32 %v1487, %v1670
        %v1672 = vpop.f32.mrb[0].mxu0
        %1673 = vmatprep.mubr.bf16.mxu0 0
        %1674 = vmatmul.mubr.bf16.gmra.mrb[0].mxu0 %v1447
        %v1675 = vpop.f32.mrb[0].mxu0
        %v1676 = vadd.f32 %v1487, %v1675
        %v1677 = vpop.f32.mrb[0].mxu0
        %v1678 = vpop.f32.mrb[0].mxu0
        %v1679 = vadd.f32 %v1487, %v1678
        %v1680 = vpop.f32.mrb[0].mxu0
        %1681 = vmatprep.mubr.bf16.mxu0 0
        %1682 = vmatmul.mubr.bf16.gmra.mrb[0].mxu0 %v1448
        %v1683 = vpop.f32.mrb[0].mxu0
        %v1684 = vadd.f32 %v1487, %v1683
        %v1685 = vpop.f32.mrb[0].mxu0
        %v1686 = vpop.f32.mrb[0].mxu0
        %v1687 = vadd.f32 %v1487, %v1686
        %v1688 = vpop.f32.mrb[0].mxu0
        %1689 = vmatprep.mubr.bf16.mxu0 0
        %1690 = vmatmul.mubr.bf16.gmra.mrb[0].mxu0 %v1449
        %v1691 = vpop.f32.mrb[0].mxu0
        %v1692 = vadd.f32 %v1487, %v1691
        %v1693 = vpop.f32.mrb[0].mxu0
        %v1694 = vpop.f32.mrb[0].mxu0
        %v1695 = vadd.f32 %v1487, %v1694
        %v1696 = vpop.f32.mrb[0].mxu0
        %1697 = vmatprep.mubr.bf16.mxu0 0
        %1698 = vmatmul.mubr.bf16.gmra.mrb[0].mxu0 %v1450
        %v1699 = vpop.f32.mrb[0].mxu0
        %v1700 = vadd.f32 %v1487, %v1699
        %v1701 = vpop.f32.mrb[0].mxu0
        %v1702 = vpop.f32.mrb[0].mxu0
        %v1703 = vadd.f32 %v1487, %v1702
        %v1704 = vpop.f32.mrb[0].mxu0
        %1705 = vmatprep.mubr.bf16.mxu0 0
        %1706 = vmatmul.mubr.bf16.gmra.mrb[0].mxu0 %v1451
        %v1707 = vpop.f32.mrb[0].mxu0
        %v1708 = vadd.f32 %v1487, %v1707
        %v1709 = vpop.f32.mrb[0].mxu0
        %v1710 = vpop.f32.mrb[0].mxu0
        %v1711 = vadd.f32 %v1487, %v1710
        %v1712 = vpop.f32.mrb[0].mxu0
        %1713 = vmatprep.mubr.bf16.mxu0 0
        %1714 = vmatmul.mubr.bf16.gmra.mrb[0].mxu0 %v1452
        %v1715 = vpop.f32.mrb[0].mxu0
        %v1716 = vadd.f32 %v1487, %v1715
        %v1717 = vpop.f32.mrb[0].mxu0
        %v1718 = vpop.f32.mrb[0].mxu0
        %v1719 = vadd.f32 %v1487, %v1718
        %v1720 = vpop.f32.mrb[0].mxu0
        %1721 = vmatprep.mubr.bf16.mxu0 0
        %1722 = vmatmul.mubr.bf16.gmra.mrb[0].mxu0 %v1453
        %v1723 = vpop.f32.mrb[0].mxu0
        %v1724 = vadd.f32 %v1487, %v1723
        %v1725 = vpop.f32.mrb[0].mxu0
        %v1726 = vpop.f32.mrb[0].mxu0
        %v1727 = vadd.f32 %v1487, %v1726
        %v1728 = vpop.f32.mrb[0].mxu0
        %1729 = vmatprep.mubr.bf16.mxu0 0
        %1730 = vmatmul.mubr.bf16.gmra.mrb[0].mxu0 %v1454
        %v1731 = vpop.f32.mrb[0].mxu0
        %v1732 = vadd.f32 %v1487, %v1731
        %v1733 = vpop.f32.mrb[0].mxu0
        %v1734 = vpop.f32.mrb[0].mxu0
        %v1735 = vadd.f32 %v1487, %v1734
        %v1736 = vpop.f32.mrb[0].mxu0
        %1737 = vmatprep.mubr.bf16.mxu0 0
        %1738 = vmatmul.mubr.bf16.gmra.mrb[0].mxu0 %v1455
        %v1739 = vpop.f32.mrb[0].mxu0
        %v1740 = vadd.f32 %v1487, %v1739
        %v1741 = vpop.f32.mrb[0].mxu0
        %v1742 = vpop.f32.mrb[0].mxu0
        %v1743 = vadd.f32 %v1487, %v1742
        %v1744 = vpop.f32.mrb[0].mxu0
        %1745 = vmatprep.mubr.bf16.mxu0 0
        %1746 = vmatmul.mubr.bf16.gmra.mrb[0].mxu0 %v1456
        %v1747 = vpop.f32.mrb[0].mxu0
        %v1748 = vadd.f32 %v1487, %v1747
        %v1749 = vpop.f32.mrb[0].mxu0
        %v1750 = vpop.f32.mrb[0].mxu0
        %v1751 = vadd.f32 %v1487, %v1750
        %v1752 = vpop.f32.mrb[0].mxu0
        %1753 = vmatprep.mubr.bf16.mxu0 0
        %1754 = vmatmul.mubr.bf16.gmra.mrb[0].mxu0 %v1457
        %v1755 = vpop.f32.mrb[0].mxu0
        %v1756 = vadd.f32 %v1487, %v1755
        %v1757 = vpop.f32.mrb[0].mxu0
        %v1758 = vpop.f32.mrb[0].mxu0
        %v1759 = vadd.f32 %v1487, %v1758
        %v1760 = vpop.f32.mrb[0].mxu0
        %1761 = vmatprep.mubr.bf16.mxu0 0
        %1762 = vmatmul.mubr.bf16.gmra.mrb[0].mxu0 %v1458
        %v1763 = vpop.f32.mrb[0].mxu0
        %v1764 = vadd.f32 %v1487, %v1763
        %v1765 = vpop.f32.mrb[0].mxu0
        %v1766 = vpop.f32.mrb[0].mxu0
        %v1767 = vadd.f32 %v1487, %v1766
        %v1768 = vpop.f32.mrb[0].mxu0
        %1769 = vmatprep.mubr.bf16.mxu0 0
        %1770 = vmatmul.mubr.bf16.gmra.mrb[0].mxu0 %v1459
        %v1771 = vpop.f32.mrb[0].mxu0
        %v1772 = vadd.f32 %v1487, %v1771
        %v1773 = vpop.f32.mrb[0].mxu0
        %v1774 = vpop.f32.mrb[0].mxu0
        %v1775 = vadd.f32 %v1487, %v1774
        %v1776 = vpop.f32.mrb[0].mxu0
        %1777 = vmatprep.mubr.bf16.mxu0 0
        %1778 = vmatmul.mubr.bf16.gmra.mrb[0].mxu0 %v1460
        %v1779 = vpop.f32.mrb[0].mxu0
        %v1780 = vadd.f32 %v1487, %v1779
        %v1781 = vpop.f32.mrb[0].mxu0
        %v1782 = vpop.f32.mrb[0].mxu0
        %v1783 = vadd.f32 %v1487, %v1782
        %v1784 = vpop.f32.mrb[0].mxu0
        %1785 = vmatprep.mubr.bf16.mxu0 0
        %1786 = vmatmul.mubr.bf16.gmra.mrb[0].mxu0 %v1461
        %v1787 = vpop.f32.mrb[0].mxu0
        %v1788 = vadd.f32 %v1487, %v1787
        %v1789 = vpop.f32.mrb[0].mxu0
        %v1790 = vpop.f32.mrb[0].mxu0
        %v1791 = vadd.f32 %v1487, %v1790
        %v1792 = vpop.f32.mrb[0].mxu0
        %1793 = vmatprep.mubr.bf16.mxu0 0
        %1794 = vmatmul.mubr.bf16.gmra.mrb[0].mxu0 %v1462
        %v1795 = vpop.f32.mrb[0].mxu0
        %v1796 = vadd.f32 %v1487, %v1795
        %v1797 = vpop.f32.mrb[0].mxu0
        %v1798 = vpop.f32.mrb[0].mxu0
        %v1799 = vadd.f32 %v1487, %v1798
        %v1800 = vpop.f32.mrb[0].mxu0
        %1801 = vmatprep.mubr.bf16.mxu0 0
        %1802 = vmatmul.mubr.bf16.gmra.mrb[0].mxu0 %v1463
        %v1803 = vpop.f32.mrb[0].mxu0
        %v1804 = vadd.f32 %v1487, %v1803
        %v1805 = vpop.f32.mrb[0].mxu0
        %v1806 = vpop.f32.mrb[0].mxu0
        %v1807 = vadd.f32 %v1487, %v1806
        %v1808 = vpop.f32.mrb[0].mxu0
        %1809 = vmatprep.mubr.bf16.mxu0 0
        %1810 = vmatmul.mubr.bf16.gmra.mrb[0].mxu0 %v1464
        %v1811 = vpop.f32.mrb[0].mxu0
        %v1812 = vadd.f32 %v1487, %v1811
        %v1813 = vpop.f32.mrb[0].mxu0
        %v1814 = vpop.f32.mrb[0].mxu0
        %v1815 = vadd.f32 %v1487, %v1814
        %v1816 = vpop.f32.mrb[0].mxu0
        %1817 = vmatprep.mubr.bf16.mxu0 0
        %1818 = vmatmul.mubr.bf16.gmra.mrb[0].mxu0 %v1465
        %v1819 = vpop.f32.mrb[0].mxu0
        %v1820 = vadd.f32 %v1487, %v1819
        %v1821 = vpop.f32.mrb[0].mxu0
        %v1822 = vpop.f32.mrb[0].mxu0
        %v1823 = vadd.f32 %v1487, %v1822
        %v1824 = vpop.f32.mrb[0].mxu0
        %1825 = vdwg.mxu0
        %v1826 = vxor.u32 %v1572, 2147483648
        %v1827 = vxor.u32 %v1575, 2147483648
        %v1828 = vxor.u32 %v1580, 2147483648
        %v1829 = vxor.u32 %v1583, 2147483648
        %v1830 = vxor.u32 %v1588, 2147483648
        %v1831 = vxor.u32 %v1591, 2147483648
        %v1832 = vxor.u32 %v1596, 2147483648
        %v1833 = vxor.u32 %v1599, 2147483648
        %v1834 = vxor.u32 %v1604, 2147483648
        %v1835 = vxor.u32 %v1607, 2147483648
        %v1836 = vxor.u32 %v1612, 2147483648
        %v1837 = vxor.u32 %v1615, 2147483648
        %v1838 = vxor.u32 %v1620, 2147483648
        %v1839 = vxor.u32 %v1623, 2147483648
        %v1840 = vxor.u32 %v1628, 2147483648
        %v1841 = vxor.u32 %v1631, 2147483648
        %v1842 = vxor.u32 %v1636, 2147483648
        %v1843 = vxor.u32 %v1639, 2147483648
        %v1844 = vxor.u32 %v1644, 2147483648
        %v1845 = vxor.u32 %v1647, 2147483648
        %v1846 = vxor.u32 %v1652, 2147483648
        %v1847 = vxor.u32 %v1655, 2147483648
        %v1848 = vxor.u32 %v1660, 2147483648
        %v1849 = vxor.u32 %v1663, 2147483648
        %v1850 = vxor.u32 %v1668, 2147483648
        %v1851 = vxor.u32 %v1671, 2147483648
        %v1852 = vxor.u32 %v1676, 2147483648
        %v1853 = vxor.u32 %v1679, 2147483648
        %v1854 = vxor.u32 %v1684, 2147483648
        %v1855 = vxor.u32 %v1687, 2147483648
        %v1856 = vxor.u32 %v1692, 2147483648
        %v1857 = vxor.u32 %v1695, 2147483648
        %v1858 = vxor.u32 %v1700, 2147483648
        %v1859 = vxor.u32 %v1703, 2147483648
        %v1860 = vxor.u32 %v1708, 2147483648
        %v1861 = vxor.u32 %v1711, 2147483648
        %v1862 = vxor.u32 %v1716, 2147483648
        %v1863 = vxor.u32 %v1719, 2147483648
        %v1864 = vxor.u32 %v1724, 2147483648
        %v1865 = vxor.u32 %v1727, 2147483648
        %v1866 = vxor.u32 %v1732, 2147483648
        %v1867 = vxor.u32 %v1735, 2147483648
        %v1868 = vxor.u32 %v1740, 2147483648
        %v1869 = vxor.u32 %v1743, 2147483648
        %v1870 = vxor.u32 %v1748, 2147483648
        %v1871 = vxor.u32 %v1751, 2147483648
        %v1872 = vxor.u32 %v1756, 2147483648
        %v1873 = vxor.u32 %v1759, 2147483648
        %v1874 = vxor.u32 %v1764, 2147483648
        %v1875 = vxor.u32 %v1767, 2147483648
        %v1876 = vxor.u32 %v1772, 2147483648
        %v1877 = vxor.u32 %v1775, 2147483648
        %v1878 = vxor.u32 %v1780, 2147483648
        %v1879 = vxor.u32 %v1783, 2147483648
        %v1880 = vxor.u32 %v1788, 2147483648
        %v1881 = vxor.u32 %v1791, 2147483648
        %v1882 = vxor.u32 %v1796, 2147483648
        %v1883 = vxor.u32 %v1799, 2147483648
        %v1884 = vxor.u32 %v1804, 2147483648
        %v1885 = vxor.u32 %v1807, 2147483648
        %v1886 = vxor.u32 %v1812, 2147483648
        %v1887 = vxor.u32 %v1815, 2147483648
        %v1888 = vxor.u32 %v1820, 2147483648
        %v1889 = vxor.u32 %v1823, 2147483648
        %v1890 = vmul.f32 %v1826, 1.442695
        %v1891 = vpow.pop %v1890
        %v1892 = vmul.f32 %v1827, 1.442695
        %v1893 = vpow.pop %v1892
        %v1894 = vmul.f32 %v1828, 1.442695
        %v1895 = vpow.pop %v1894
        %v1896 = vmul.f32 %v1829, 1.442695
        %v1897 = vpow.pop %v1896
        %v1898 = vmul.f32 %v1830, 1.442695
        %v1899 = vpow.pop %v1898
        %v1900 = vmul.f32 %v1831, 1.442695
        %v1901 = vpow.pop %v1900
        %v1902 = vmul.f32 %v1832, 1.442695
        %v1903 = vpow.pop %v1902
        %v1904 = vmul.f32 %v1833, 1.442695
        %v1905 = vpow.pop %v1904
        %v1906 = vmul.f32 %v1834, 1.442695
        %v1907 = vpow.pop %v1906
        %v1908 = vmul.f32 %v1835, 1.442695
        %v1909 = vpow.pop %v1908
        %v1910 = vmul.f32 %v1836, 1.442695
        %v1911 = vpow.pop %v1910
        %v1912 = vmul.f32 %v1837, 1.442695
        %v1913 = vpow.pop %v1912
        %v1914 = vmul.f32 %v1838, 1.442695
        %v1915 = vpow.pop %v1914
        %v1916 = vmul.f32 %v1839, 1.442695
        %v1917 = vpow.pop %v1916
        %v1918 = vmul.f32 %v1840, 1.442695
        %v1919 = vpow.pop %v1918
        %v1920 = vmul.f32 %v1841, 1.442695
        %v1921 = vpow.pop %v1920
        %v1922 = vmul.f32 %v1842, 1.442695
        %v1923 = vpow.pop %v1922
        %v1924 = vmul.f32 %v1843, 1.442695
        %v1925 = vpow.pop %v1924
        %v1926 = vmul.f32 %v1844, 1.442695
        %v1927 = vpow.pop %v1926
        %v1928 = vmul.f32 %v1845, 1.442695
        %v1929 = vpow.pop %v1928
        %v1930 = vmul.f32 %v1846, 1.442695
        %v1931 = vpow.pop %v1930
        %v1932 = vmul.f32 %v1847, 1.442695
        %v1933 = vpow.pop %v1932
        %v1934 = vmul.f32 %v1848, 1.442695
        %v1935 = vpow.pop %v1934
        %v1936 = vmul.f32 %v1849, 1.442695
        %v1937 = vpow.pop %v1936
        %v1938 = vmul.f32 %v1850, 1.442695
        %v1939 = vpow.pop %v1938
        %v1940 = vmul.f32 %v1851, 1.442695
        %v1941 = vpow.pop %v1940
        %v1942 = vmul.f32 %v1852, 1.442695
        %v1943 = vpow.pop %v1942
        %v1944 = vmul.f32 %v1853, 1.442695
        %v1945 = vpow.pop %v1944
        %v1946 = vmul.f32 %v1854, 1.442695
        %v1947 = vpow.pop %v1946
        %v1948 = vmul.f32 %v1855, 1.442695
        %v1949 = vpow.pop %v1948
        %v1950 = vmul.f32 %v1856, 1.442695
        %v1951 = vpow.pop %v1950
        %v1952 = vmul.f32 %v1857, 1.442695
        %v1953 = vpow.pop %v1952
        %v1954 = vmul.f32 %v1858, 1.442695
        %v1955 = vpow.pop %v1954
        %v1956 = vmul.f32 %v1859, 1.442695
        %v1957 = vpow.pop %v1956
        %v1958 = vmul.f32 %v1860, 1.442695
        %v1959 = vpow.pop %v1958
        %v1960 = vmul.f32 %v1861, 1.442695
        %v1961 = vpow.pop %v1960
        %v1962 = vmul.f32 %v1862, 1.442695
        %v1963 = vpow.pop %v1962
        %v1964 = vmul.f32 %v1863, 1.442695
        %v1965 = vpow.pop %v1964
        %v1966 = vmul.f32 %v1864, 1.442695
        %v1967 = vpow.pop %v1966
        %v1968 = vmul.f32 %v1865, 1.442695
        %v1969 = vpow.pop %v1968
        %v1970 = vmul.f32 %v1866, 1.442695
        %v1971 = vpow.pop %v1970
        %v1972 = vmul.f32 %v1867, 1.442695
        %v1973 = vpow.pop %v1972
        %v1974 = vmul.f32 %v1868, 1.442695
        %v1975 = vpow.pop %v1974
        %v1976 = vmul.f32 %v1869, 1.442695
        %v1977 = vpow.pop %v1976
        %v1978 = vmul.f32 %v1870, 1.442695
        %v1979 = vpow.pop %v1978
        %v1980 = vmul.f32 %v1871, 1.442695
        %v1981 = vpow.pop %v1980
        %v1982 = vmul.f32 %v1872, 1.442695
        %v1983 = vpow.pop %v1982
        %v1984 = vmul.f32 %v1873, 1.442695
        %v1985 = vpow.pop %v1984
        %v1986 = vmul.f32 %v1874, 1.442695
        %v1987 = vpow.pop %v1986
        %v1988 = vmul.f32 %v1875, 1.442695
        %v1989 = vpow.pop %v1988
        %v1990 = vmul.f32 %v1876, 1.442695
        %v1991 = vpow.pop %v1990
        %v1992 = vmul.f32 %v1877, 1.442695
        %v1993 = vpow.pop %v1992
        %v1994 = vmul.f32 %v1878, 1.442695
        %v1995 = vpow.pop %v1994
        %v1996 = vmul.f32 %v1879, 1.442695
        %v1997 = vpow.pop %v1996
        %v1998 = vmul.f32 %v1880, 1.442695
        %v1999 = vpow.pop %v1998
        %v2000 = vmul.f32 %v1881, 1.442695
        %v2001 = vpow.pop %v2000
        %v2002 = vmul.f32 %v1882, 1.442695
        %v2003 = vpow.pop %v2002
        %v2004 = vmul.f32 %v1883, 1.442695
        %v2005 = vpow.pop %v2004
        %v2006 = vmul.f32 %v1884, 1.442695
        %v2007 = vpow.pop %v2006
        %v2008 = vmul.f32 %v1885, 1.442695
        %v2009 = vpow.pop %v2008
        %v2010 = vmul.f32 %v1886, 1.442695
        %v2011 = vpow.pop %v2010
        %v2012 = vmul.f32 %v1887, 1.442695
        %v2013 = vpow.pop %v2012
        %v2014 = vmul.f32 %v1888, 1.442695
        %v2015 = vpow.pop %v2014
        %v2016 = vmul.f32 %v1889, 1.442695
        %v2017 = vpow.pop %v2016
        %v2018 = vadd.f32 %v1891, 1.0
        %v2019 = vadd.f32 %v1893, 1.0
        %v2020 = vadd.f32 %v1895, 1.0
        %v2021 = vadd.f32 %v1897, 1.0
        %v2022 = vadd.f32 %v1899, 1.0
        %v2023 = vadd.f32 %v1901, 1.0
        %v2024 = vadd.f32 %v1903, 1.0
        %v2025 = vadd.f32 %v1905, 1.0
        %v2026 = vadd.f32 %v1907, 1.0
        %v2027 = vadd.f32 %v1909, 1.0
        %v2028 = vadd.f32 %v1911, 1.0
        %v2029 = vadd.f32 %v1913, 1.0
        %v2030 = vadd.f32 %v1915, 1.0
        %v2031 = vadd.f32 %v1917, 1.0
        %v2032 = vadd.f32 %v1919, 1.0
        %v2033 = vadd.f32 %v1921, 1.0
        %v2034 = vadd.f32 %v1923, 1.0
        %v2035 = vadd.f32 %v1925, 1.0
        %v2036 = vadd.f32 %v1927, 1.0
        %v2037 = vadd.f32 %v1929, 1.0
        %v2038 = vadd.f32 %v1931, 1.0
        %v2039 = vadd.f32 %v1933, 1.0
        %v2040 = vadd.f32 %v1935, 1.0
        %v2041 = vadd.f32 %v1937, 1.0
        %v2042 = vadd.f32 %v1939, 1.0
        %v2043 = vadd.f32 %v1941, 1.0
        %v2044 = vadd.f32 %v1943, 1.0
        %v2045 = vadd.f32 %v1945, 1.0
        %v2046 = vadd.f32 %v1947, 1.0
        %v2047 = vadd.f32 %v1949, 1.0
        %v2048 = vadd.f32 %v1951, 1.0
        %v2049 = vadd.f32 %v1953, 1.0
        %v2050 = vadd.f32 %v1955, 1.0
        %v2051 = vadd.f32 %v1957, 1.0
        %v2052 = vadd.f32 %v1959, 1.0
        %v2053 = vadd.f32 %v1961, 1.0
        %v2054 = vadd.f32 %v1963, 1.0
        %v2055 = vadd.f32 %v1965, 1.0
        %v2056 = vadd.f32 %v1967, 1.0
        %v2057 = vadd.f32 %v1969, 1.0
        %v2058 = vadd.f32 %v1971, 1.0
        %v2059 = vadd.f32 %v1973, 1.0
        %v2060 = vadd.f32 %v1975, 1.0
        %v2061 = vadd.f32 %v1977, 1.0
        %v2062 = vadd.f32 %v1979, 1.0
        %v2063 = vadd.f32 %v1981, 1.0
        %v2064 = vadd.f32 %v1983, 1.0
        %v2065 = vadd.f32 %v1985, 1.0
        %v2066 = vadd.f32 %v1987, 1.0
        %v2067 = vadd.f32 %v1989, 1.0
        %v2068 = vadd.f32 %v1991, 1.0
        %v2069 = vadd.f32 %v1993, 1.0
        %v2070 = vadd.f32 %v1995, 1.0
        %v2071 = vadd.f32 %v1997, 1.0
        %v2072 = vadd.f32 %v1999, 1.0
        %v2073 = vadd.f32 %v2001, 1.0
        %v2074 = vadd.f32 %v2003, 1.0
        %v2075 = vadd.f32 %v2005, 1.0
        %v2076 = vadd.f32 %v2007, 1.0
        %v2077 = vadd.f32 %v2009, 1.0
        %v2078 = vadd.f32 %v2011, 1.0
        %v2079 = vadd.f32 %v2013, 1.0
        %v2080 = vadd.f32 %v2015, 1.0
        %v2081 = vadd.f32 %v2017, 1.0
        %v2082 = vrcp.pop %v2018
        %v2083 = vmul.f32 1.0, %v2082
        %v2084 = vrcp.pop %v2019
        %v2085 = vmul.f32 1.0, %v2084
        %v2086 = vrcp.pop %v2020
        %v2087 = vmul.f32 1.0, %v2086
        %v2088 = vrcp.pop %v2021
        %v2089 = vmul.f32 1.0, %v2088
        %v2090 = vrcp.pop %v2022
        %v2091 = vmul.f32 1.0, %v2090
        %v2092 = vrcp.pop %v2023
        %v2093 = vmul.f32 1.0, %v2092
        %v2094 = vrcp.pop %v2024
        %v2095 = vmul.f32 1.0, %v2094
        %v2096 = vrcp.pop %v2025
        %v2097 = vmul.f32 1.0, %v2096
        %v2098 = vrcp.pop %v2026
        %v2099 = vmul.f32 1.0, %v2098
        %v2100 = vrcp.pop %v2027
        %v2101 = vmul.f32 1.0, %v2100
        %v2102 = vrcp.pop %v2028
        %v2103 = vmul.f32 1.0, %v2102
        %v2104 = vrcp.pop %v2029
        %v2105 = vmul.f32 1.0, %v2104
        %v2106 = vrcp.pop %v2030
        %v2107 = vmul.f32 1.0, %v2106
        %v2108 = vrcp.pop %v2031
        %v2109 = vmul.f32 1.0, %v2108
        %v2110 = vrcp.pop %v2032
        %v2111 = vmul.f32 1.0, %v2110
        %v2112 = vrcp.pop %v2033
        %v2113 = vmul.f32 1.0, %v2112
        %v2114 = vrcp.pop %v2034
        %v2115 = vmul.f32 1.0, %v2114
        %v2116 = vrcp.pop %v2035
        %v2117 = vmul.f32 1.0, %v2116
        %v2118 = vrcp.pop %v2036
        %v2119 = vmul.f32 1.0, %v2118
        %v2120 = vrcp.pop %v2037
        %v2121 = vmul.f32 1.0, %v2120
        %v2122 = vrcp.pop %v2038
        %v2123 = vmul.f32 1.0, %v2122
        %v2124 = vrcp.pop %v2039
        %v2125 = vmul.f32 1.0, %v2124
        %v2126 = vrcp.pop %v2040
        %v2127 = vmul.f32 1.0, %v2126
        %v2128 = vrcp.pop %v2041
        %v2129 = vmul.f32 1.0, %v2128
        %v2130 = vrcp.pop %v2042
        %v2131 = vmul.f32 1.0, %v2130
        %v2132 = vrcp.pop %v2043
        %v2133 = vmul.f32 1.0, %v2132
        %v2134 = vrcp.pop %v2044
        %v2135 = vmul.f32 1.0, %v2134
        %v2136 = vrcp.pop %v2045
        %v2137 = vmul.f32 1.0, %v2136
        %v2138 = vrcp.pop %v2046
        %v2139 = vmul.f32 1.0, %v2138
        %v2140 = vrcp.pop %v2047
        %v2141 = vmul.f32 1.0, %v2140
        %v2142 = vrcp.pop %v2048
        %v2143 = vmul.f32 1.0, %v2142
        %v2144 = vrcp.pop %v2049
        %v2145 = vmul.f32 1.0, %v2144
        %v2146 = vrcp.pop %v2050
        %v2147 = vmul.f32 1.0, %v2146
        %v2148 = vrcp.pop %v2051
        %v2149 = vmul.f32 1.0, %v2148
        %v2150 = vrcp.pop %v2052
        %v2151 = vmul.f32 1.0, %v2150
        %v2152 = vrcp.pop %v2053
        %v2153 = vmul.f32 1.0, %v2152
        %v2154 = vrcp.pop %v2054
        %v2155 = vmul.f32 1.0, %v2154
        %v2156 = vrcp.pop %v2055
        %v2157 = vmul.f32 1.0, %v2156
        %v2158 = vrcp.pop %v2056
        %v2159 = vmul.f32 1.0, %v2158
        %v2160 = vrcp.pop %v2057
        %v2161 = vmul.f32 1.0, %v2160
        %v2162 = vrcp.pop %v2058
        %v2163 = vmul.f32 1.0, %v2162
        %v2164 = vrcp.pop %v2059
        %v2165 = vmul.f32 1.0, %v2164
        %v2166 = vrcp.pop %v2060
        %v2167 = vmul.f32 1.0, %v2166
        %v2168 = vrcp.pop %v2061
        %v2169 = vmul.f32 1.0, %v2168
        %v2170 = vrcp.pop %v2062
        %v2171 = vmul.f32 1.0, %v2170
        %v2172 = vrcp.pop %v2063
        %v2173 = vmul.f32 1.0, %v2172
        %v2174 = vrcp.pop %v2064
        %v2175 = vmul.f32 1.0, %v2174
        %v2176 = vrcp.pop %v2065
        %v2177 = vmul.f32 1.0, %v2176
        %v2178 = vrcp.pop %v2066
        %v2179 = vmul.f32 1.0, %v2178
        %v2180 = vrcp.pop %v2067
        %v2181 = vmul.f32 1.0, %v2180
        %v2182 = vrcp.pop %v2068
        %v2183 = vmul.f32 1.0, %v2182
        %v2184 = vrcp.pop %v2069
        %v2185 = vmul.f32 1.0, %v2184
        %v2186 = vrcp.pop %v2070
        %v2187 = vmul.f32 1.0, %v2186
        %v2188 = vrcp.pop %v2071
        %v2189 = vmul.f32 1.0, %v2188
        %v2190 = vrcp.pop %v2072
        %v2191 = vmul.f32 1.0, %v2190
        %v2192 = vrcp.pop %v2073
        %v2193 = vmul.f32 1.0, %v2192
        %v2194 = vrcp.pop %v2074
        %v2195 = vmul.f32 1.0, %v2194
        %v2196 = vrcp.pop %v2075
        %v2197 = vmul.f32 1.0, %v2196
        %v2198 = vrcp.pop %v2076
        %v2199 = vmul.f32 1.0, %v2198
        %v2200 = vrcp.pop %v2077
        %v2201 = vmul.f32 1.0, %v2200
        %v2202 = vrcp.pop %v2078
        %v2203 = vmul.f32 1.0, %v2202
        %v2204 = vrcp.pop %v2079
        %v2205 = vmul.f32 1.0, %v2204
        %v2206 = vrcp.pop %v2080
        %v2207 = vmul.f32 1.0, %v2206
        %v2208 = vrcp.pop %v2081
        %v2209 = vmul.f32 1.0, %v2208
        %2210 = vst [vmem:[%s272] sm:$0xff] %v2083
        %2211 = vst [vmem:[%s272 + $0x8] sm:$0xff] %v2085
        %2212 = vst [vmem:[%s272 + $0x10] sm:$0xff] %v2087
        %2213 = vst [vmem:[%s272 + $0x18] sm:$0xff] %v2089
        %2214 = vst [vmem:[%s272 + $0x20] sm:$0xff] %v2091
        %2215 = vst [vmem:[%s272 + $0x28] sm:$0xff] %v2093
        %2216 = vst [vmem:[%s272 + $0x30] sm:$0xff] %v2095
        %2217 = vst [vmem:[%s272 + $0x38] sm:$0xff] %v2097
        %2218 = vst [vmem:[%s272 + $0x40] sm:$0xff] %v2099
        %2219 = vst [vmem:[%s272 + $0x48] sm:$0xff] %v2101
        %2220 = vst [vmem:[%s272 + $0x50] sm:$0xff] %v2103
        %2221 = vst [vmem:[%s272 + $0x58] sm:$0xff] %v2105
        %2222 = vst [vmem:[%s272 + $0x60] sm:$0xff] %v2107
        %2223 = vst [vmem:[%s272 + $0x68] sm:$0xff] %v2109
        %2224 = vst [vmem:[%s272 + $0x70] sm:$0xff] %v2111
        %2225 = vst [vmem:[%s272 + $0x78] sm:$0xff] %v2113
        %2226 = vst [vmem:[%s272 + $0x80] sm:$0xff] %v2115
        %2227 = vst [vmem:[%s272 + $0x88] sm:$0xff] %v2117
        %2228 = vst [vmem:[%s272 + $0x90] sm:$0xff] %v2119
        %2229 = vst [vmem:[%s272 + $0x98] sm:$0xff] %v2121
        %2230 = vst [vmem:[%s272 + $0xa0] sm:$0xff] %v2123
        %2231 = vst [vmem:[%s272 + $0xa8] sm:$0xff] %v2125
        %2232 = vst [vmem:[%s272 + $0xb0] sm:$0xff] %v2127
        %2233 = vst [vmem:[%s272 + $0xb8] sm:$0xff] %v2129
        %2234 = vst [vmem:[%s272 + $0xc0] sm:$0xff] %v2131
        %2235 = vst [vmem:[%s272 + $0xc8] sm:$0xff] %v2133
        %2236 = vst [vmem:[%s272 + $0xd0] sm:$0xff] %v2135
        %2237 = vst [vmem:[%s272 + $0xd8] sm:$0xff] %v2137
        %2238 = vst [vmem:[%s272 + $0xe0] sm:$0xff] %v2139
        %2239 = vst [vmem:[%s272 + $0xe8] sm:$0xff] %v2141
        %2240 = vst [vmem:[%s272 + $0xf0] sm:$0xff] %v2143
        %2241 = vst [vmem:[%s272 + $0xf8] sm:$0xff] %v2145
        %2242 = vst [vmem:[%s272 + $0x100] sm:$0xff] %v2147
        %2243 = vst [vmem:[%s272 + $0x108] sm:$0xff] %v2149
        %2244 = vst [vmem:[%s272 + $0x110] sm:$0xff] %v2151
        %2245 = vst [vmem:[%s272 + $0x118] sm:$0xff] %v2153
        %2246 = vst [vmem:[%s272 + $0x120] sm:$0xff] %v2155
        %2247 = vst [vmem:[%s272 + $0x128] sm:$0xff] %v2157
        %2248 = vst [vmem:[%s272 + $0x130] sm:$0xff] %v2159
        %2249 = vst [vmem:[%s272 + $0x138] sm:$0xff] %v2161
        %2250 = vst [vmem:[%s272 + $0x140] sm:$0xff] %v2163
        %2251 = vst [vmem:[%s272 + $0x148] sm:$0xff] %v2165
        %2252 = vst [vmem:[%s272 + $0x150] sm:$0xff] %v2167
        %2253 = vst [vmem:[%s272 + $0x158] sm:$0xff] %v2169
        %2254 = vst [vmem:[%s272 + $0x160] sm:$0xff] %v2171
        %2255 = vst [vmem:[%s272 + $0x168] sm:$0xff] %v2173
        %2256 = vst [vmem:[%s272 + $0x170] sm:$0xff] %v2175
        %2257 = vst [vmem:[%s272 + $0x178] sm:$0xff] %v2177
        %2258 = vst [vmem:[%s272 + $0x180] sm:$0xff] %v2179
        %2259 = vst [vmem:[%s272 + $0x188] sm:$0xff] %v2181
        %2260 = vst [vmem:[%s272 + $0x190] sm:$0xff] %v2183
        %2261 = vst [vmem:[%s272 + $0x198] sm:$0xff] %v2185
        %2262 = vst [vmem:[%s272 + $0x1a0] sm:$0xff] %v2187
        %2263 = vst [vmem:[%s272 + $0x1a8] sm:$0xff] %v2189
        %2264 = vst [vmem:[%s272 + $0x1b0] sm:$0xff] %v2191
        %2265 = vst [vmem:[%s272 + $0x1b8] sm:$0xff] %v2193
        %2266 = vst [vmem:[%s272 + $0x1c0] sm:$0xff] %v2195
        %2267 = vst [vmem:[%s272 + $0x1c8] sm:$0xff] %v2197
        %2268 = vst [vmem:[%s272 + $0x1d0] sm:$0xff] %v2199
        %2269 = vst [vmem:[%s272 + $0x1d8] sm:$0xff] %v2201
        %2270 = vst [vmem:[%s272 + $0x1e0] sm:$0xff] %v2203
        %2271 = vst [vmem:[%s272 + $0x1e8] sm:$0xff] %v2205
        %2272 = vst [vmem:[%s272 + $0x1f0] sm:$0xff] %v2207
        %2273 = vst [vmem:[%s272 + $0x1f8] sm:$0xff] %v2209
        %s2274 = sand.u32 %s181, 1
        %s2275 = scalar_lea.sflag [#allocation3], %s2274
        %s2276 = sand.u32 %s181, 1
        %s2277 = smul.addr %s2276, 512
        %s2278 = scalar_lea.vmem [#allocation2], %s2277
        // Predicated region
        $region49: #{decoder_forward.1} parent=47 // pred_check
          %p2279 = pneg %p191
        $region50: #{decoder_forward.1} parent=47 // pred_check_branch
          %2281 = sbr.rel (%p2279) target = $region52
        $region51: #{decoder_forward.1} parent=47 // pred_region
          %s2282 = smul.u32 64, %s21
          %s2284 = ssub.s32 8192, 8192
          %2285 = vsyncadd %s2275, %s2284
          %s2286 = smul.addr %s2282, 128
          %s2287 = scalar_lea.hbm %s7, %s2286
          %s2288 = sshll.u32 %s2278, 4
          %s2289 = int_to_ptr.vmem [resolvable:$true] %s2288
          %2294 = dma.vmem_to_hbm [thread:$0]  %s2289, 8192, %s2287, %s2275, 128, 128, 8
        $region52: #{decoder_forward.1} parent=47 // pred_fallthru
          _
      $region48: #{decoder_forward.1} parent=5 // pred_fallthru
        _
      %p2295 = scmp.le.s32.totalorder 2, %s16
      // Predicated region
      $region53: #{decoder_forward.1} parent=5 // pred_check
        %p2296 = pneg %p2295
      $region54: #{decoder_forward.1} parent=5 // pred_check_branch
        %2298 = sbr.rel (%p2296) target = $region56
      $region55: #{decoder_forward.1} parent=5 // pred_region
        %s2299 = ssub.s32 %s16, 2
        // Predicated region
        $region57: #{decoder_forward.1} parent=55 // pred_check
          %p2300 = pneg %p197
        $region58: #{decoder_forward.1} parent=55 // pred_check_branch
          %2302 = sbr.rel (%p2300) target = $region60
        $region59: #{decoder_forward.1} parent=55 // pred_region
          %s2303 = sand.u32 %s182, 1
          %s2304 = scalar_lea.sflag [#allocation3], %s2303
          %s2305 = sand.u32 %s182, 1
          %s2306 = smul.addr %s2305, 512
          %s2307 = scalar_lea.vmem [#allocation2], %s2306
          %2308 = dma.done %s2304, 8192
        $region60: #{decoder_forward.1} parent=55 // pred_fallthru
          _
      $region56: #{decoder_forward.1} parent=5 // pred_fallthru
        _
    $region6: #{decoder_forward.1} parent=1 // loop_footer
      %s20 = sadd.s32 1, %s16
    $region7: #{decoder_forward.1} parent=1 // loop_footer_branch
      %15 = sbr.rel target = $region3
    $region8: #{decoder_forward.1} parent=1 // loop_exit
      _
    %2309 = vsyncpa [#allocation3], 1
    %s2310 = scalar_lea.sflag [#allocation3], 1
    %2311 = vsyncpa %s2310, 1

</llo_original>
